<compile_context>
chip_gen: v5e
topology: v5e:2x2
jax: 0.10.0
libtpu: 0.0.40
codegen_flags: <defaults>
</compile_context>

<pallas_src>
import functools

import jax
import jax.numpy as jnp
from jax import lax
from jax.experimental import pallas as pl
from jax.experimental.pallas import tpu as pltpu

EPS = 1e-5


# ----------------------------- in-kernel helpers -----------------------------
def _conv3x3_bias_relu(xp4, w_ref, b_ref, H, W, Cin, Cout):
  """3x3 'SAME' conv + bias + ReLU on one zero-padded image block.

  xp4   : (1, H+2, W+2, Cin) f32 ref-or-value (zero-padded image)
  w_ref : (9, Cin, Cout) bf16 ref (flattened HWIO taps, k = dy*3+dx)
  b_ref : (1, Cout) f32 ref
  returns (H*W, Cout) f32
  """
  M = H * W
  acc = jnp.zeros((M, Cout), jnp.float32)
  # TODO(synk): collapse the 9 taps into a single (M, 9*Cin) x (9*Cin, Cout)
  # im2col matmul (one real-K MXU op) and/or do the dx shifts with pltpu.roll;
  # kept as 9 accumulated bf16 dots here for guaranteed lowering at tiny C.
  for k in range(9):
    dy, dx = k // 3, k % 3
    tap = xp4[:, dy:dy + H, dx:dx + W, :].reshape(M, Cin).astype(jnp.bfloat16)
    acc += jnp.dot(tap, w_ref[k], preferred_element_type=jnp.float32)
  return jnp.maximum(acc + b_ref[...], 0.0)


def _conv1_kernel(x_ref, w1_ref, b1_ref, ypad_ref, s_ref, ss_ref,
                  *, H, W, Cin, Cout):
  """conv1 + bias + ReLU for one image; emits zero-halo-padded activation and
  fused per-image BN1 partial statistics (sum, sum of squares)."""
  y = _conv3x3_bias_relu(x_ref, w1_ref, b1_ref, H, W, Cin, Cout)   # (M, Cout) f32

  # Fused single-pass BN statistics (reduced across the batch outside).
  s_ref[...] = jnp.sum(y, axis=0, keepdims=True).reshape(1, 1, Cout)
  ss_ref[...] = jnp.sum(y * y, axis=0, keepdims=True).reshape(1, 1, Cout)

  # Emit the activation already zero-padded for conv2: only the 1-pixel border
  # is written with zeros (no full-buffer zeroing pass).
  ypad_ref[:, 0:1, :, :] = jnp.zeros((1, 1, W + 2, Cout), jnp.float32)
  ypad_ref[:, H + 1:H + 2, :, :] = jnp.zeros((1, 1, W + 2, Cout), jnp.float32)
  ypad_ref[:, :, 0:1, :] = jnp.zeros((1, H + 2, 1, Cout), jnp.float32)
  ypad_ref[:, :, W + 1:W + 2, :] = jnp.zeros((1, H + 2, 1, Cout), jnp.float32)
  ypad_ref[:, 1:H + 1, 1:W + 1, :] = y.reshape(1, H, W, Cout)


def _conv2_kernel(ypad_ref, sc_ref, sh_ref, w2_ref, b2_ref,
                  z_ref, s_ref, ss_ref, *, H, W, Cout):
  """BN1 affine (batch stats computed outside) + conv2 + bias + ReLU for one
  image; emits the activation and fused per-image BN2 partial statistics."""
  yp = ypad_ref[...]                                     # (1, H+2, W+2, Cout) f32

  # Apply the BN1 affine only on the interior so the conv zero-padding halo
  # stays exactly zero (affine(0) would otherwise become `shift`).
  row = lax.broadcasted_iota(jnp.int32, yp.shape, 1)
  col = lax.broadcasted_iota(jnp.int32, yp.shape, 2)
  interior = (row >= 1) & (row <= H) & (col >= 1) & (col <= W)
  ybn = jnp.where(
      interior,
      yp * sc_ref[...].reshape(1, 1, 1, Cout) + sh_ref[...].reshape(1, 1, 1, Cout),
      0.0)

  z = _conv3x3_bias_relu(ybn, w2_ref, b2_ref, H, W, Cout, Cout)    # (M, Cout) f32

  s_ref[...] = jnp.sum(z, axis=0, keepdims=True).reshape(1, 1, Cout)
  ss_ref[...] = jnp.sum(z * z, axis=0, keepdims=True).reshape(1, 1, Cout)
  z_ref[...] = z.reshape(1, H, W, Cout)


# --------------------------------- wrapper -----------------------------------
def double_conv_pallas(x_nchw, params):
  """DoubleConv forward.  Input/output are NCHW float32 like PyTorch."""
  N, Cin, H, W = x_nchw.shape
  Cout = params["w1"].shape[-1]
  M_total = N * H * W

  # TODO(synk): fold the NCHW<->NHWC relayout and the input halo pad into the
  # kernels (index_map offsets / manual halo DMA) to drop these extra HBM passes.
  x = jnp.transpose(x_nchw, (0, 2, 3, 1)).astype(jnp.float32)         # NHWC
  x_pad = jnp.pad(x, ((0, 0), (1, 1), (1, 1), (0, 0)))

  # Conv weights as flattened 3x3 taps (HWIO -> (9, Cin, Cout)), bf16 for the MXU.
  w1 = params["w1"].reshape(9, Cin, Cout).astype(jnp.bfloat16)
  w2 = params["w2"].reshape(9, Cout, Cout).astype(jnp.bfloat16)
  b1 = params["b1"].reshape(1, Cout).astype(jnp.float32)
  b2 = params["b2"].reshape(1, Cout).astype(jnp.float32)

  cparams = pltpu.CompilerParams(
      dimension_semantics=("parallel",),        # megacore sharding on v7x
      vmem_limit_bytes=32 * 1024 * 1024)

  def _full_spec(shape):
    return pl.BlockSpec(shape, lambda n: (0,) * len(shape))

  # ---- pass 1: conv1 + bias + ReLU (+ BN1 partial stats), one image / grid step
  y_pad, s1, ss1 = pl.pallas_call(
      functools.partial(_conv1_kernel, H=H, W=W, Cin=Cin, Cout=Cout),
      grid=(N,),
      in_specs=[
          pl.BlockSpec((1, H + 2, W + 2, Cin), lambda n: (n, 0, 0, 0)),
          _full_spec((9, Cin, Cout)),
          _full_spec((1, Cout)),
      ],
      out_specs=(
          pl.BlockSpec((1, H + 2, W + 2, Cout), lambda n: (n, 0, 0, 0)),
          pl.BlockSpec((1, 1, Cout), lambda n: (n, 0, 0)),
          pl.BlockSpec((1, 1, Cout), lambda n: (n, 0, 0)),
      ),
      out_shape=(
          jax.ShapeDtypeStruct((N, H + 2, W + 2, Cout), jnp.float32),
          jax.ShapeDtypeStruct((N, 1, Cout), jnp.float32),
          jax.ShapeDtypeStruct((N, 1, Cout), jnp.float32),
      ),
      compiler_params=cparams,
  )(x_pad, w1, b1)

  # BN1 batch statistics -> per-channel affine (tiny host-side reduction, f32).
  mean1 = jnp.sum(s1, axis=(0, 1)) / M_total
  var1 = jnp.maximum(jnp.sum(ss1, axis=(0, 1)) / M_total - mean1 * mean1, 0.0)
  scale1 = params["g1"].astype(jnp.float32) * lax.rsqrt(var1 + EPS)
  shift1 = params["be1"].astype(jnp.float32) - mean1 * scale1

  # ---- pass 2: BN1 affine + conv2 + bias + ReLU (+ BN2 partial stats)
  z, s2, ss2 = pl.pallas_call(
      functools.partial(_conv2_kernel, H=H, W=W, Cout=Cout),
      grid=(N,),
      in_specs=[
          pl.BlockSpec((1, H + 2, W + 2, Cout), lambda n: (n, 0, 0, 0)),
          _full_spec((1, Cout)),
          _full_spec((1, Cout)),
          _full_spec((9, Cout, Cout)),
          _full_spec((1, Cout)),
      ],
      out_specs=(
          pl.BlockSpec((1, H, W, Cout), lambda n: (n, 0, 0, 0)),
          pl.BlockSpec((1, 1, Cout), lambda n: (n, 0, 0)),
          pl.BlockSpec((1, 1, Cout), lambda n: (n, 0, 0)),
      ),
      out_shape=(
          jax.ShapeDtypeStruct((N, H, W, Cout), jnp.float32),
          jax.ShapeDtypeStruct((N, 1, Cout), jnp.float32),
          jax.ShapeDtypeStruct((N, 1, Cout), jnp.float32),
      ),
      compiler_params=cparams,
  )(y_pad, scale1.reshape(1, Cout), shift1.reshape(1, Cout), w2, b2)

  mean2 = jnp.sum(s2, axis=(0, 1)) / M_total
  var2 = jnp.maximum(jnp.sum(ss2, axis=(0, 1)) / M_total - mean2 * mean2, 0.0)
  scale2 = params["g2"].astype(jnp.float32) * lax.rsqrt(var2 + EPS)
  shift2 = params["be2"].astype(jnp.float32) - mean2 * scale2

  # Final BN2 affine fused with the NHWC -> NCHW transpose (single XLA pass).
  out = z * scale2.reshape(1, 1, 1, Cout) + shift2.reshape(1, 1, 1, Cout)
  return jnp.transpose(out, (0, 3, 1, 2))


# ----------------------------- pure-JAX reference ----------------------------
def double_conv_ref(x_nchw, params):
  x = jnp.transpose(x_nchw, (0, 2, 3, 1)).astype(jnp.float32)

  def conv(inp, w_hwio, b):
    y = lax.conv_general_dilated(
        inp, w_hwio, window_strides=(1, 1), padding="SAME",
        dimension_numbers=("NHWC", "HWIO", "NHWC"))
    return y + b.reshape(1, 1, 1, -1)

  def relu_bn(y, g, be):
    y = jnp.maximum(y, 0.0)
    mean = jnp.mean(y, axis=(0, 1, 2), keepdims=True)
    var = jnp.mean((y - mean) ** 2, axis=(0, 1, 2), keepdims=True)
    return (y - mean) * lax.rsqrt(var + EPS) * g.reshape(1, 1, 1, -1) \
        + be.reshape(1, 1, 1, -1)

  y = relu_bn(conv(x, params["w1"], params["b1"]), params["g1"], params["be1"])
  z = relu_bn(conv(y, params["w2"], params["b2"]), params["g2"], params["be2"])
  return jnp.transpose(z, (0, 3, 1, 2))


if __name__ == "__main__":
  key = jax.random.PRNGKey(0)
  N, Cin, Cout, H, W = 2, 4, 8, 16, 16

  keys = jax.random.split(key, 7)
  x = jax.random.normal(keys[0], (N, Cin, H, W), dtype=jnp.float32)

  # Deterministic parameter init (conv weights stored directly as HWIO).
  params = {
      "w1": jax.random.normal(keys[1], (3, 3, Cin, Cout), jnp.float32) * 0.1,
      "b1": jax.random.normal(keys[2], (Cout,), jnp.float32) * 0.1,
      "g1": 1.0 + 0.1 * jax.random.normal(keys[3], (Cout,), jnp.float32),
      "be1": 0.1 * jax.random.normal(keys[4], (Cout,), jnp.float32),
      "w2": jax.random.normal(keys[5], (3, 3, Cout, Cout), jnp.float32) * 0.1,
      "b2": jax.random.normal(keys[6], (Cout,), jnp.float32) * 0.1,
      "g2": jnp.linspace(0.9, 1.1, Cout, dtype=jnp.float32),
      "be2": jnp.linspace(-0.1, 0.1, Cout, dtype=jnp.float32),
  }

  out = jax.block_until_ready(double_conv_pallas(x, params))
  ref = jax.block_until_ready(double_conv_ref(x, params))

  assert out.shape == (N, Cout, H, W)
  # bf16 MXU operands (f32 accumulate) vs. the f32 reference => relaxed tolerance.
  err = jnp.max(jnp.abs(out - ref))
  assert jnp.allclose(out, ref, atol=5e-2, rtol=5e-2), f"max abs err = {err}"

  print("KERNEL_OK")
</pallas_src>

<mosaic_0001>
module attributes {stable_mosaic.version = 11 : i64} {
  func.func @_conv1_kernel(%arg0: i32, %arg1: memref<1x18x18x4xf32, #tpu.memory_space<vmem>>, %arg2: memref<9x4x8xbf16, #tpu.memory_space<vmem>>, %arg3: memref<1x8xf32, #tpu.memory_space<vmem>>, %arg4: memref<1x18x18x8xf32, #tpu.memory_space<vmem>>, %arg5: memref<1x1x8xf32, #tpu.memory_space<vmem>>, %arg6: memref<1x1x8xf32, #tpu.memory_space<vmem>>) attributes {dimension_semantics = [#tpu.dimension_semantics<parallel>], iteration_bounds = array<i64: 2>, scalar_prefetch = 0 : i64, scratch_operands = 0 : i64, tpu.core_type = #tpu.core_type<tc>, window_params = [{transform_indices = @transform_0, window_bounds = array<i64: 1, 18, 18, 4>}, {pipeline_mode = #tpu.pipeline_mode<synchronous>, transform_indices = @transform_1, window_bounds = array<i64: 9, 4, 8>}, {pipeline_mode = #tpu.pipeline_mode<synchronous>, transform_indices = @transform_2, window_bounds = array<i64: 1, 8>}, {transform_indices = @transform_3, window_bounds = array<i64: 1, 18, 18, 8>}, {transform_indices = @transform_4, window_bounds = array<i64: 1, 1, 8>}, {transform_indices = @transform_5, window_bounds = array<i64: 1, 1, 8>}]} {
    %cst = arith.constant 0.000000e+00 : f32
    %0 = vector.broadcast %cst : f32 to vector<256x8xf32>
    %c0 = arith.constant 0 : index
    %c0_0 = arith.constant 0 : index
    %c0_1 = arith.constant 0 : index
    %c0_2 = arith.constant 0 : index
    %1 = vector.load %arg1[%c0, %c0_0, %c0_1, %c0_2] : memref<1x18x18x4xf32, #tpu.memory_space<vmem>>, vector<1x16x16x4xf32>
    %2 = vector.shape_cast %1 : vector<1x16x16x4xf32> to vector<256x4xf32>
    %3 = arith.truncf %2 : vector<256x4xf32> to vector<256x4xbf16>
    %c0_3 = arith.constant 0 : index
    %c0_4 = arith.constant 0 : index
    %c0_5 = arith.constant 0 : index
    %4 = vector.load %arg2[%c0_3, %c0_4, %c0_5] : memref<9x4x8xbf16, #tpu.memory_space<vmem>>, vector<1x4x8xbf16>
    %5 = vector.shape_cast %4 : vector<1x4x8xbf16> to vector<4x8xbf16>
    %cst_6 = arith.constant dense<0.000000e+00> : vector<256x8xf32>
    %6 = tpu.matmul %3, %5, %cst_6 {dimension_numbers = #tpu.dot_dimension_numbers<[1], [0], [0], [1], [0, 0, 1, 1], [], []>} : vector<256x4xbf16>, vector<4x8xbf16>, vector<256x8xf32> -> vector<256x8xf32>
    %7 = arith.addf %0, %6 : vector<256x8xf32>
    %c0_7 = arith.constant 0 : index
    %c0_8 = arith.constant 0 : index
    %c1 = arith.constant 1 : index
    %c0_9 = arith.constant 0 : index
    %8 = vector.load %arg1[%c0_7, %c0_8, %c1, %c0_9] : memref<1x18x18x4xf32, #tpu.memory_space<vmem>>, vector<1x16x16x4xf32>
    %9 = vector.shape_cast %8 : vector<1x16x16x4xf32> to vector<256x4xf32>
    %10 = arith.truncf %9 : vector<256x4xf32> to vector<256x4xbf16>
    %c1_10 = arith.constant 1 : index
    %c0_11 = arith.constant 0 : index
    %c0_12 = arith.constant 0 : index
    %11 = vector.load %arg2[%c1_10, %c0_11, %c0_12] : memref<9x4x8xbf16, #tpu.memory_space<vmem>>, vector<1x4x8xbf16>
    %12 = vector.shape_cast %11 : vector<1x4x8xbf16> to vector<4x8xbf16>
    %cst_13 = arith.constant dense<0.000000e+00> : vector<256x8xf32>
    %13 = tpu.matmul %10, %12, %cst_13 {dimension_numbers = #tpu.dot_dimension_numbers<[1], [0], [0], [1], [0, 0, 1, 1], [], []>} : vector<256x4xbf16>, vector<4x8xbf16>, vector<256x8xf32> -> vector<256x8xf32>
    %14 = arith.addf %7, %13 : vector<256x8xf32>
    %c0_14 = arith.constant 0 : index
    %c0_15 = arith.constant 0 : index
    %c2 = arith.constant 2 : index
    %c0_16 = arith.constant 0 : index
    %15 = vector.load %arg1[%c0_14, %c0_15, %c2, %c0_16] : memref<1x18x18x4xf32, #tpu.memory_space<vmem>>, vector<1x16x16x4xf32>
    %16 = vector.shape_cast %15 : vector<1x16x16x4xf32> to vector<256x4xf32>
    %17 = arith.truncf %16 : vector<256x4xf32> to vector<256x4xbf16>
    %c2_17 = arith.constant 2 : index
    %c0_18 = arith.constant 0 : index
    %c0_19 = arith.constant 0 : index
    %18 = vector.load %arg2[%c2_17, %c0_18, %c0_19] : memref<9x4x8xbf16, #tpu.memory_space<vmem>>, vector<1x4x8xbf16>
    %19 = vector.shape_cast %18 : vector<1x4x8xbf16> to vector<4x8xbf16>
    %cst_20 = arith.constant dense<0.000000e+00> : vector<256x8xf32>
    %20 = tpu.matmul %17, %19, %cst_20 {dimension_numbers = #tpu.dot_dimension_numbers<[1], [0], [0], [1], [0, 0, 1, 1], [], []>} : vector<256x4xbf16>, vector<4x8xbf16>, vector<256x8xf32> -> vector<256x8xf32>
    %21 = arith.addf %14, %20 : vector<256x8xf32>
    %c0_21 = arith.constant 0 : index
    %c1_22 = arith.constant 1 : index
    %c0_23 = arith.constant 0 : index
    %c0_24 = arith.constant 0 : index
    %22 = vector.load %arg1[%c0_21, %c1_22, %c0_23, %c0_24] : memref<1x18x18x4xf32, #tpu.memory_space<vmem>>, vector<1x16x16x4xf32>
    %23 = vector.shape_cast %22 : vector<1x16x16x4xf32> to vector<256x4xf32>
    %24 = arith.truncf %23 : vector<256x4xf32> to vector<256x4xbf16>
    %c3 = arith.constant 3 : index
    %c0_25 = arith.constant 0 : index
    %c0_26 = arith.constant 0 : index
    %25 = vector.load %arg2[%c3, %c0_25, %c0_26] : memref<9x4x8xbf16, #tpu.memory_space<vmem>>, vector<1x4x8xbf16>
    %26 = vector.shape_cast %25 : vector<1x4x8xbf16> to vector<4x8xbf16>
    %cst_27 = arith.constant dense<0.000000e+00> : vector<256x8xf32>
    %27 = tpu.matmul %24, %26, %cst_27 {dimension_numbers = #tpu.dot_dimension_numbers<[1], [0], [0], [1], [0, 0, 1, 1], [], []>} : vector<256x4xbf16>, vector<4x8xbf16>, vector<256x8xf32> -> vector<256x8xf32>
    %28 = arith.addf %21, %27 : vector<256x8xf32>
    %c0_28 = arith.constant 0 : index
    %c1_29 = arith.constant 1 : index
    %c1_30 = arith.constant 1 : index
    %c0_31 = arith.constant 0 : index
    %29 = vector.load %arg1[%c0_28, %c1_29, %c1_30, %c0_31] : memref<1x18x18x4xf32, #tpu.memory_space<vmem>>, vector<1x16x16x4xf32>
    %30 = vector.shape_cast %29 : vector<1x16x16x4xf32> to vector<256x4xf32>
    %31 = arith.truncf %30 : vector<256x4xf32> to vector<256x4xbf16>
    %c4 = arith.constant 4 : index
    %c0_32 = arith.constant 0 : index
    %c0_33 = arith.constant 0 : index
    %32 = vector.load %arg2[%c4, %c0_32, %c0_33] : memref<9x4x8xbf16, #tpu.memory_space<vmem>>, vector<1x4x8xbf16>
    %33 = vector.shape_cast %32 : vector<1x4x8xbf16> to vector<4x8xbf16>
    %cst_34 = arith.constant dense<0.000000e+00> : vector<256x8xf32>
    %34 = tpu.matmul %31, %33, %cst_34 {dimension_numbers = #tpu.dot_dimension_numbers<[1], [0], [0], [1], [0, 0, 1, 1], [], []>} : vector<256x4xbf16>, vector<4x8xbf16>, vector<256x8xf32> -> vector<256x8xf32>
    %35 = arith.addf %28, %34 : vector<256x8xf32>
    %c0_35 = arith.constant 0 : index
    %c1_36 = arith.constant 1 : index
    %c2_37 = arith.constant 2 : index
    %c0_38 = arith.constant 0 : index
    %36 = vector.load %arg1[%c0_35, %c1_36, %c2_37, %c0_38] : memref<1x18x18x4xf32, #tpu.memory_space<vmem>>, vector<1x16x16x4xf32>
    %37 = vector.shape_cast %36 : vector<1x16x16x4xf32> to vector<256x4xf32>
    %38 = arith.truncf %37 : vector<256x4xf32> to vector<256x4xbf16>
    %c5 = arith.constant 5 : index
    %c0_39 = arith.constant 0 : index
    %c0_40 = arith.constant 0 : index
    %39 = vector.load %arg2[%c5, %c0_39, %c0_40] : memref<9x4x8xbf16, #tpu.memory_space<vmem>>, vector<1x4x8xbf16>
    %40 = vector.shape_cast %39 : vector<1x4x8xbf16> to vector<4x8xbf16>
    %cst_41 = arith.constant dense<0.000000e+00> : vector<256x8xf32>
    %41 = tpu.matmul %38, %40, %cst_41 {dimension_numbers = #tpu.dot_dimension_numbers<[1], [0], [0], [1], [0, 0, 1, 1], [], []>} : vector<256x4xbf16>, vector<4x8xbf16>, vector<256x8xf32> -> vector<256x8xf32>
    %42 = arith.addf %35, %41 : vector<256x8xf32>
    %c0_42 = arith.constant 0 : index
    %c2_43 = arith.constant 2 : index
    %c0_44 = arith.constant 0 : index
    %c0_45 = arith.constant 0 : index
    %43 = vector.load %arg1[%c0_42, %c2_43, %c0_44, %c0_45] : memref<1x18x18x4xf32, #tpu.memory_space<vmem>>, vector<1x16x16x4xf32>
    %44 = vector.shape_cast %43 : vector<1x16x16x4xf32> to vector<256x4xf32>
    %45 = arith.truncf %44 : vector<256x4xf32> to vector<256x4xbf16>
    %c6 = arith.constant 6 : index
    %c0_46 = arith.constant 0 : index
    %c0_47 = arith.constant 0 : index
    %46 = vector.load %arg2[%c6, %c0_46, %c0_47] : memref<9x4x8xbf16, #tpu.memory_space<vmem>>, vector<1x4x8xbf16>
    %47 = vector.shape_cast %46 : vector<1x4x8xbf16> to vector<4x8xbf16>
    %cst_48 = arith.constant dense<0.000000e+00> : vector<256x8xf32>
    %48 = tpu.matmul %45, %47, %cst_48 {dimension_numbers = #tpu.dot_dimension_numbers<[1], [0], [0], [1], [0, 0, 1, 1], [], []>} : vector<256x4xbf16>, vector<4x8xbf16>, vector<256x8xf32> -> vector<256x8xf32>
    %49 = arith.addf %42, %48 : vector<256x8xf32>
    %c0_49 = arith.constant 0 : index
    %c2_50 = arith.constant 2 : index
    %c1_51 = arith.constant 1 : index
    %c0_52 = arith.constant 0 : index
    %50 = vector.load %arg1[%c0_49, %c2_50, %c1_51, %c0_52] : memref<1x18x18x4xf32, #tpu.memory_space<vmem>>, vector<1x16x16x4xf32>
    %51 = vector.shape_cast %50 : vector<1x16x16x4xf32> to vector<256x4xf32>
    %52 = arith.truncf %51 : vector<256x4xf32> to vector<256x4xbf16>
    %c7 = arith.constant 7 : index
    %c0_53 = arith.constant 0 : index
    %c0_54 = arith.constant 0 : index
    %53 = vector.load %arg2[%c7, %c0_53, %c0_54] : memref<9x4x8xbf16, #tpu.memory_space<vmem>>, vector<1x4x8xbf16>
    %54 = vector.shape_cast %53 : vector<1x4x8xbf16> to vector<4x8xbf16>
    %cst_55 = arith.constant dense<0.000000e+00> : vector<256x8xf32>
    %55 = tpu.matmul %52, %54, %cst_55 {dimension_numbers = #tpu.dot_dimension_numbers<[1], [0], [0], [1], [0, 0, 1, 1], [], []>} : vector<256x4xbf16>, vector<4x8xbf16>, vector<256x8xf32> -> vector<256x8xf32>
    %56 = arith.addf %49, %55 : vector<256x8xf32>
    %c0_56 = arith.constant 0 : index
    %c2_57 = arith.constant 2 : index
    %c2_58 = arith.constant 2 : index
    %c0_59 = arith.constant 0 : index
    %57 = vector.load %arg1[%c0_56, %c2_57, %c2_58, %c0_59] : memref<1x18x18x4xf32, #tpu.memory_space<vmem>>, vector<1x16x16x4xf32>
    %58 = vector.shape_cast %57 : vector<1x16x16x4xf32> to vector<256x4xf32>
    %59 = arith.truncf %58 : vector<256x4xf32> to vector<256x4xbf16>
    %c8 = arith.constant 8 : index
    %c0_60 = arith.constant 0 : index
    %c0_61 = arith.constant 0 : index
    %60 = vector.load %arg2[%c8, %c0_60, %c0_61] : memref<9x4x8xbf16, #tpu.memory_space<vmem>>, vector<1x4x8xbf16>
    %61 = vector.shape_cast %60 : vector<1x4x8xbf16> to vector<4x8xbf16>
    %cst_62 = arith.constant dense<0.000000e+00> : vector<256x8xf32>
    %62 = tpu.matmul %59, %61, %cst_62 {dimension_numbers = #tpu.dot_dimension_numbers<[1], [0], [0], [1], [0, 0, 1, 1], [], []>} : vector<256x4xbf16>, vector<4x8xbf16>, vector<256x8xf32> -> vector<256x8xf32>
    %63 = arith.addf %56, %62 : vector<256x8xf32>
    %c0_63 = arith.constant 0 : index
    %c0_64 = arith.constant 0 : index
    %64 = vector.load %arg3[%c0_63, %c0_64] : memref<1x8xf32, #tpu.memory_space<vmem>>, vector<1x8xf32>
    %65 = vector.broadcast %64 : vector<1x8xf32> to vector<256x8xf32>
    %66 = arith.addf %63, %65 : vector<256x8xf32>
    %cst_65 = arith.constant 0.000000e+00 : f32
    %67 = vector.broadcast %cst_65 : f32 to vector<256x8xf32>
    %68 = arith.maximumf %66, %67 : vector<256x8xf32>
    %cst_66 = arith.constant dense<0.000000e+00> : vector<8xf32>
    %69 = vector.multi_reduction <add>, %68, %cst_66 [0] : vector<256x8xf32> to vector<8xf32>
    %70 = vector.shape_cast %69 : vector<8xf32> to vector<1x8xf32>
    %71 = vector.shape_cast %70 : vector<1x8xf32> to vector<1x1x8xf32>
    %c0_67 = arith.constant 0 : index
    %c0_68 = arith.constant 0 : index
    %c0_69 = arith.constant 0 : index
    %72 = vector.load %arg5[%c0_67, %c0_68, %c0_69] : memref<1x1x8xf32, #tpu.memory_space<vmem>>, vector<1x1x8xf32>
    tpu.vector_store %arg5[%c0_67, %c0_68, %c0_69], %71 {strides = array<i32>} : memref<1x1x8xf32, #tpu.memory_space<vmem>>, vector<1x1x8xf32>,
    %73 = arith.mulf %68, %68 : vector<256x8xf32>
    %cst_70 = arith.constant dense<0.000000e+00> : vector<8xf32>
    %74 = vector.multi_reduction <add>, %73, %cst_70 [0] : vector<256x8xf32> to vector<8xf32>
    %75 = vector.shape_cast %74 : vector<8xf32> to vector<1x8xf32>
    %76 = vector.shape_cast %75 : vector<1x8xf32> to vector<1x1x8xf32>
    %c0_71 = arith.constant 0 : index
    %c0_72 = arith.constant 0 : index
    %c0_73 = arith.constant 0 : index
    %77 = vector.load %arg6[%c0_71, %c0_72, %c0_73] : memref<1x1x8xf32, #tpu.memory_space<vmem>>, vector<1x1x8xf32>
    tpu.vector_store %arg6[%c0_71, %c0_72, %c0_73], %76 {strides = array<i32>} : memref<1x1x8xf32, #tpu.memory_space<vmem>>, vector<1x1x8xf32>,
    %cst_74 = arith.constant 0.000000e+00 : f32
    %78 = vector.broadcast %cst_74 : f32 to vector<1x1x18x8xf32>
    %c0_75 = arith.constant 0 : index
    %c0_76 = arith.constant 0 : index
    %c0_77 = arith.constant 0 : index
    %c0_78 = arith.constant 0 : index
    %79 = vector.load %arg4[%c0_75, %c0_76, %c0_77, %c0_78] : memref<1x18x18x8xf32, #tpu.memory_space<vmem>>, vector<1x1x18x8xf32>
    tpu.vector_store %arg4[%c0_75, %c0_76, %c0_77, %c0_78], %78 {strides = array<i32>} : memref<1x18x18x8xf32, #tpu.memory_space<vmem>>, vector<1x1x18x8xf32>,
    %cst_79 = arith.constant 0.000000e+00 : f32
    %80 = vector.broadcast %cst_79 : f32 to vector<1x1x18x8xf32>
    %c0_80 = arith.constant 0 : index
    %c17 = arith.constant 17 : index
    %c0_81 = arith.constant 0 : index
    %c0_82 = arith.constant 0 : index
    %81 = vector.load %arg4[%c0_80, %c17, %c0_81, %c0_82] : memref<1x18x18x8xf32, #tpu.memory_space<vmem>>, vector<1x1x18x8xf32>
    tpu.vector_store %arg4[%c0_80, %c17, %c0_81, %c0_82], %80 {strides = array<i32>} : memref<1x18x18x8xf32, #tpu.memory_space<vmem>>, vector<1x1x18x8xf32>,
    %cst_83 = arith.constant 0.000000e+00 : f32
    %82 = vector.broadcast %cst_83 : f32 to vector<1x18x1x8xf32>
    %c0_84 = arith.constant 0 : index
    %c0_85 = arith.constant 0 : index
    %c0_86 = arith.constant 0 : index
    %c0_87 = arith.constant 0 : index
    %83 = vector.load %arg4[%c0_84, %c0_85, %c0_86, %c0_87] : memref<1x18x18x8xf32, #tpu.memory_space<vmem>>, vector<1x18x1x8xf32>
    tpu.vector_store %arg4[%c0_84, %c0_85, %c0_86, %c0_87], %82 {strides = array<i32>} : memref<1x18x18x8xf32, #tpu.memory_space<vmem>>, vector<1x18x1x8xf32>,
    %cst_88 = arith.constant 0.000000e+00 : f32
    %84 = vector.broadcast %cst_88 : f32 to vector<1x18x1x8xf32>
    %c0_89 = arith.constant 0 : index
    %c0_90 = arith.constant 0 : index
    %c17_91 = arith.constant 17 : index
    %c0_92 = arith.constant 0 : index
    %85 = vector.load %arg4[%c0_89, %c0_90, %c17_91, %c0_92] : memref<1x18x18x8xf32, #tpu.memory_space<vmem>>, vector<1x18x1x8xf32>
    tpu.vector_store %arg4[%c0_89, %c0_90, %c17_91, %c0_92], %84 {strides = array<i32>} : memref<1x18x18x8xf32, #tpu.memory_space<vmem>>, vector<1x18x1x8xf32>,
    %86 = vector.shape_cast %68 : vector<256x8xf32> to vector<1x16x16x8xf32>
    %c0_93 = arith.constant 0 : index
    %c1_94 = arith.constant 1 : index
    %c1_95 = arith.constant 1 : index
    %c0_96 = arith.constant 0 : index
    %87 = vector.load %arg4[%c0_93, %c1_94, %c1_95, %c0_96] : memref<1x18x18x8xf32, #tpu.memory_space<vmem>>, vector<1x16x16x8xf32>
    tpu.vector_store %arg4[%c0_93, %c1_94, %c1_95, %c0_96], %86 {strides = array<i32>} : memref<1x18x18x8xf32, #tpu.memory_space<vmem>>, vector<1x16x16x8xf32>,
    return
  }
  func.func @transform_0(%arg0: i32) -> (i32, i32, i32, i32) {
    %c0_i32 = arith.constant 0 : i32
    %c0_i32_0 = arith.constant 0 : i32
    %c0_i32_1 = arith.constant 0 : i32
    %c0_i32_2 = arith.constant 0 : i32
    return %arg0, %c0_i32, %c0_i32_0, %c0_i32_1 : i32, i32, i32, i32
  }
  func.func @transform_1(%arg0: i32) -> (i32, i32, i32) {
    %c0_i32 = arith.constant 0 : i32
    %c0_i32_0 = arith.constant 0 : i32
    %c0_i32_1 = arith.constant 0 : i32
    %c0_i32_2 = arith.constant 0 : i32
    return %c0_i32, %c0_i32_0, %c0_i32_1 : i32, i32, i32
  }
  func.func @transform_2(%arg0: i32) -> (i32, i32) {
    %c0_i32 = arith.constant 0 : i32
    %c0_i32_0 = arith.constant 0 : i32
    %c0_i32_1 = arith.constant 0 : i32
    return %c0_i32, %c0_i32_0 : i32, i32
  }
  func.func @transform_3(%arg0: i32) -> (i32, i32, i32, i32) {
    %c0_i32 = arith.constant 0 : i32
    %c0_i32_0 = arith.constant 0 : i32
    %c0_i32_1 = arith.constant 0 : i32
    %c0_i32_2 = arith.constant 0 : i32
    return %arg0, %c0_i32, %c0_i32_0, %c0_i32_1 : i32, i32, i32, i32
  }
  func.func @transform_4(%arg0: i32) -> (i32, i32, i32) {
    %c0_i32 = arith.constant 0 : i32
    %c0_i32_0 = arith.constant 0 : i32
    %c0_i32_1 = arith.constant 0 : i32
    return %arg0, %c0_i32, %c0_i32_0 : i32, i32, i32
  }
  func.func @transform_5(%arg0: i32) -> (i32, i32, i32) {
    %c0_i32 = arith.constant 0 : i32
    %c0_i32_0 = arith.constant 0 : i32
    %c0_i32_1 = arith.constant 0 : i32
    return %arg0, %c0_i32, %c0_i32_0 : i32, i32, i32
  }
}

</mosaic_0001>

<llo_original>
// kernel: tpu_custom_call.1
$region0: #{tpu_custom_call.1}
  #allocation0 [shape = 'u32[]', space=smem, size = 0x4, offset = 0x4, fixed_abs, tag = 'smem constant byte address 0x4 - core index']
  #allocation1 [shape = 'u32[72,128]{1,0:T(1,128)}', space=vmem, size = 0x9000, scoped, tag = 'internal scratch']
  %s0 = inlined_call_operand.vmem [shape: f32[2,18,18,4], index: 0, kind: input, shape index: {}]
  %s1 = inlined_call_operand.vmem [shape: bf16[9,4,8], index: 1, kind: input, shape index: {}]
  %s2 = inlined_call_operand.vmem [shape: f32[1,8], index: 2, kind: input, shape index: {}]
  %s3 = inlined_call_operand.vmem [shape: f32[2,18,18,8], index: 3, kind: output, shape index: {0}]
  %s4 = inlined_call_operand.hbm [shape: f32[2,1,8], index: 4, kind: output, shape index: {1}]
  %s5 = inlined_call_operand.hbm [shape: f32[2,1,8], index: 5, kind: output, shape index: {2}]
  %6 = xla_tuple %s3, %s4, %s5
  %s7 = sld [smem:[#allocation0]]
  $region61: #{tpu_custom_call.1} parent=0
    _
  %s9 = ssub.s32 1, %s7
  %s10 = scalar_select 0, %s9, %s7
  $region1: #{tpu_custom_call.1} parent=0
    #allocation2 [shape = 'u8[1024]{0}', space=vmem, size = 0x400, scoped, tag = 'output window, operand 1']
    #allocation3 [shape = 's32[2]{0}', space=sflag, size = 0x8, scoped, tag = 'scoped memory for tpu_custom_call.1']
    #allocation4 [shape = 'u8[1024]{0}', space=vmem, size = 0x400, scoped, tag = 'output window, operand 2']
    #allocation5 [shape = 's32[2]{0}', space=sflag, size = 0x8, scoped, tag = 'scoped memory for tpu_custom_call.1']
    %11 = vsyncpa [#allocation3], 0
    %s12 = scalar_lea.sflag [#allocation3], 1
    %13 = vsyncpa %s12, 0
    %14 = vsyncpa [#allocation5], 0
    %s15 = scalar_lea.sflag [#allocation5], 1
    %16 = vsyncpa %s15, 0
    loop: start=0, step=1, limit=4
    $region2: #{tpu_custom_call.1} parent=1 // loop_pre_header
      _
    $region3: #{tpu_custom_call.1} parent=1 // loop_header
      %s18 = sphi 0, %s22
      %p19 = scmp.ge.s32.totalorder %s18, 4
      %s28 = sphi 0, %s30
      %s31 = sphi 0, %s28
      %s32 = sphi 0, %s31
      %s48 = sphi 0, %s32
      %s52 = sphi 0, %s52
      %s54 = sphi 0, %s52
      %s55 = sphi 0, %s54
      %s69 = sphi 0, %s55
      %s73 = sphi 0, %s73
      %s75 = sphi 0, %s73
      %s76 = sphi 0, %s75
      %s90 = sphi 0, %s76
      %s96 = sphi 0, %s98
      %s99 = sphi 0, %s96
      %s100 = sphi 0, %s99
      %s116 = sphi 0, %s100
      %s122 = sphi 0, %s124
      %s125 = sphi 0, %s122
      %s126 = sphi 0, %s125
      %s142 = sphi 0, %s126
      %s148 = sphi 0, %s150
      %s151 = sphi 0, %s148
      %s152 = sphi 0, %s151
      %s168 = sphi 0, %s152
    $region4: #{tpu_custom_call.1} parent=1 // loop_header_branch
      %21 = sbr.rel (%p19) target = $region8
    $region5: #{tpu_custom_call.1} parent=1 // loop_body
      %s23 = ssub.s32 %s18, 1
      %s24 = ssub.s32 %s18, 2
      %s25 = sadd.s32 %s18, 1
      %s26 = ssub.s32 %s18, %s25
      %p27 = scmp.eq.s32.totalorder %s26, 0
      %s29 = sadd.s32 %s28, 1
      %s30 = scalar_select %p27, %s28, %s29
      %p33 = pneg %p27
      %p34 = scmp.eq.s32.totalorder %s18, 1
      %p35 = por %p33, %p34
      %p36 = scmp.ne.s32.totalorder %s28, %s31
      %p37 = scmp.eq.s32.totalorder %s18, 0
      %p38 = por %p36, %p37
      %p39 = scmp.ne.s32.totalorder %s28, %s31
      %p40 = scmp.eq.s32.totalorder %s23, 1
      %p41 = por %p39, %p40
      %p42 = scmp.ne.s32.totalorder %s31, %s32
      %p43 = scmp.eq.s32.totalorder %s23, 0
      %p44 = por %p42, %p43
      %p45 = scmp.ne.s32.totalorder %s31, %s32
      %p46 = scmp.eq.s32.totalorder %s24, 1
      %p47 = por %p45, %p46
      %p49 = scmp.ne.s32.totalorder %s32, %s48
      %p50 = scmp.eq.s32.totalorder %s24, 0
      %p51 = por %p49, %p50
      %s53 = sadd.s32 %s52, 1
      %p56 = scmp.eq.s32.totalorder %s18, 1
      %p57 = scmp.ne.s32.totalorder %s52, %s54
      %p58 = scmp.eq.s32.totalorder %s18, 0
      %p59 = por %p57, %p58
      %p60 = scmp.ne.s32.totalorder %s52, %s54
      %p61 = scmp.eq.s32.totalorder %s23, 1
      %p62 = por %p60, %p61
      %p63 = scmp.ne.s32.totalorder %s54, %s55
      %p64 = scmp.eq.s32.totalorder %s23, 0
      %p65 = por %p63, %p64
      %p66 = scmp.ne.s32.totalorder %s54, %s55
      %p67 = scmp.eq.s32.totalorder %s24, 1
      %p68 = por %p66, %p67
      %p70 = scmp.ne.s32.totalorder %s55, %s69
      %p71 = scmp.eq.s32.totalorder %s24, 0
      %p72 = por %p70, %p71
      %s74 = sadd.s32 %s73, 1
      %p77 = scmp.eq.s32.totalorder %s18, 1
      %p78 = scmp.ne.s32.totalorder %s73, %s75
      %p79 = scmp.eq.s32.totalorder %s18, 0
      %p80 = por %p78, %p79
      %p81 = scmp.ne.s32.totalorder %s73, %s75
      %p82 = scmp.eq.s32.totalorder %s23, 1
      %p83 = por %p81, %p82
      %p84 = scmp.ne.s32.totalorder %s75, %s76
      %p85 = scmp.eq.s32.totalorder %s23, 0
      %p86 = por %p84, %p85
      %p87 = scmp.ne.s32.totalorder %s75, %s76
      %p88 = scmp.eq.s32.totalorder %s24, 1
      %p89 = por %p87, %p88
      %p91 = scmp.ne.s32.totalorder %s76, %s90
      %p92 = scmp.eq.s32.totalorder %s24, 0
      %p93 = por %p91, %p92
      %s94 = ssub.s32 %s18, %s25
      %p95 = scmp.eq.s32.totalorder %s94, 0
      %s97 = sadd.s32 %s96, 1
      %s98 = scalar_select %p95, %s96, %s97
      %p101 = pneg %p95
      %p102 = scmp.eq.s32.totalorder %s18, 1
      %p103 = por %p101, %p102
      %p104 = scmp.ne.s32.totalorder %s96, %s99
      %p105 = scmp.eq.s32.totalorder %s18, 0
      %p106 = por %p104, %p105
      %p107 = scmp.ne.s32.totalorder %s96, %s99
      %p108 = scmp.eq.s32.totalorder %s23, 1
      %p109 = por %p107, %p108
      %p110 = scmp.ne.s32.totalorder %s99, %s100
      %p111 = scmp.eq.s32.totalorder %s23, 0
      %p112 = por %p110, %p111
      %p113 = scmp.ne.s32.totalorder %s99, %s100
      %p114 = scmp.eq.s32.totalorder %s24, 1
      %p115 = por %p113, %p114
      %p117 = scmp.ne.s32.totalorder %s100, %s116
      %p118 = scmp.eq.s32.totalorder %s24, 0
      %p119 = por %p117, %p118
      %s120 = ssub.s32 %s18, %s25
      %p121 = scmp.eq.s32.totalorder %s120, 0
      %s123 = sadd.s32 %s122, 1
      %s124 = scalar_select %p121, %s122, %s123
      %p127 = pneg %p121
      %p128 = scmp.eq.s32.totalorder %s18, 1
      %p129 = por %p127, %p128
      %p130 = scmp.ne.s32.totalorder %s122, %s125
      %p131 = scmp.eq.s32.totalorder %s18, 0
      %p132 = por %p130, %p131
      %p133 = scmp.ne.s32.totalorder %s122, %s125
      %p134 = scmp.eq.s32.totalorder %s23, 1
      %p135 = por %p133, %p134
      %p136 = scmp.ne.s32.totalorder %s125, %s126
      %p137 = scmp.eq.s32.totalorder %s23, 0
      %p138 = por %p136, %p137
      %p139 = scmp.ne.s32.totalorder %s125, %s126
      %p140 = scmp.eq.s32.totalorder %s24, 1
      %p141 = por %p139, %p140
      %p143 = scmp.ne.s32.totalorder %s126, %s142
      %p144 = scmp.eq.s32.totalorder %s24, 0
      %p145 = por %p143, %p144
      %s146 = ssub.s32 %s18, %s25
      %p147 = scmp.eq.s32.totalorder %s146, 0
      %s149 = sadd.s32 %s148, 1
      %s150 = scalar_select %p147, %s148, %s149
      %p153 = pneg %p147
      %p154 = scmp.eq.s32.totalorder %s18, 1
      %p155 = por %p153, %p154
      %p156 = scmp.ne.s32.totalorder %s148, %s151
      %p157 = scmp.eq.s32.totalorder %s18, 0
      %p158 = por %p156, %p157
      %p159 = scmp.ne.s32.totalorder %s148, %s151
      %p160 = scmp.eq.s32.totalorder %s23, 1
      %p161 = por %p159, %p160
      %p162 = scmp.ne.s32.totalorder %s151, %s152
      %p163 = scmp.eq.s32.totalorder %s23, 0
      %p164 = por %p162, %p163
      %p165 = scmp.ne.s32.totalorder %s151, %s152
      %p166 = scmp.eq.s32.totalorder %s24, 1
      %p167 = por %p165, %p166
      %p169 = scmp.ne.s32.totalorder %s152, %s168
      %p170 = scmp.eq.s32.totalorder %s24, 0
      %p171 = por %p169, %p170
      %p172 = scmp.le.s32.totalorder 1, %s18
      %p173 = scmp.lt.s32.totalorder %s18, 3
      %p174 = pnand %p172, %p173
      %p175 = pneg %p174
      // Predicated region
      $region9: #{tpu_custom_call.1} parent=5 // pred_check
        _
      $region10: #{tpu_custom_call.1} parent=5 // pred_check_branch
        %177 = sbr.rel (%p174) target = $region12
      $region11: #{tpu_custom_call.1} parent=5 // pred_region
        %s178 = ssub.s32 %s18, 1
        // Predicated region
        $region13: #{tpu_custom_call.1} parent=11 // pred_check
          %p179 = pneg %p65
        $region14: #{tpu_custom_call.1} parent=11 // pred_check_branch
          %181 = sbr.rel (%p179) target = $region16
        $region15: #{tpu_custom_call.1} parent=11 // pred_region
          _
        $region16: #{tpu_custom_call.1} parent=11 // pred_fallthru
          _
        // Predicated region
        $region17: #{tpu_custom_call.1} parent=11 // pred_check
          %p182 = pneg %p86
        $region18: #{tpu_custom_call.1} parent=11 // pred_check_branch
          %184 = sbr.rel (%p182) target = $region20
        $region19: #{tpu_custom_call.1} parent=11 // pred_region
          _
        $region20: #{tpu_custom_call.1} parent=11 // pred_fallthru
          _
      $region12: #{tpu_custom_call.1} parent=5 // pred_fallthru
        _
      %p185 = scmp.lt.s32.totalorder %s18, 2
      // Predicated region
      $region21: #{tpu_custom_call.1} parent=5 // pred_check
        %p186 = pneg %p185
      $region22: #{tpu_custom_call.1} parent=5 // pred_check_branch
        %188 = sbr.rel (%p186) target = $region24
      $region23: #{tpu_custom_call.1} parent=5 // pred_region
        // Predicated region
        $region25: #{tpu_custom_call.1} parent=23 // pred_check
          %p189 = pneg %p38
        $region26: #{tpu_custom_call.1} parent=23 // pred_check_branch
          %191 = sbr.rel (%p189) target = $region28
        $region27: #{tpu_custom_call.1} parent=23 // pred_region
          %p192 = scmp.lt.s32.totalorder %s18, 1
          %s193 = scalar_select %p192, %s18, 1
          %s194 = smul.addr %s193, 54
          %s195 = smul.addr %s194, 8
          %s196 = scalar_lea.vmem %s0, %s195
        $region28: #{tpu_custom_call.1} parent=23 // pred_fallthru
          _
      $region24: #{tpu_custom_call.1} parent=5 // pred_fallthru
        _
      %p197 = scmp.le.s32.totalorder 1, %s18
      %p198 = scmp.lt.s32.totalorder %s18, 3
      %p199 = pnand %p197, %p198
      %p200 = pneg %p199
      // Predicated region
      $region29: #{tpu_custom_call.1} parent=5 // pred_check
        _
      $region30: #{tpu_custom_call.1} parent=5 // pred_check_branch
        %202 = sbr.rel (%p199) target = $region32
      $region31: #{tpu_custom_call.1} parent=5 // pred_region
        %s203 = ssub.s32 %s18, 1
        %p204 = scmp.lt.s32.totalorder %s23, 1
        %s205 = scalar_select %p204, %s23, 1
        %s206 = smul.addr %s205, 54
        %s207 = smul.addr %s206, 8
        %s208 = scalar_lea.vmem %s0, %s207
        %p209 = pneg %p44
        %p210 = pneg %p41
        %p211 = pneg %p65
        %p212 = pneg %p62
        %p213 = pneg %p86
        %p214 = pneg %p83
        %p215 = pneg %p112
        %p216 = pneg %p109
        %p217 = scmp.lt.s32.totalorder %s23, 1
        %s218 = scalar_select %p217, %s23, 1
        %s219 = smul.addr %s218, 54
        %s220 = smul.addr %s219, 8
        %s221 = scalar_lea.vmem %s3, %s220
        %p222 = pneg %p138
        %p223 = pneg %p135
        %s224 = sand.u32 %s125, 1
        %s225 = scalar_lea.sflag [#allocation3], %s224
        %s226 = sand.u32 %s125, 1
        %s227 = scalar_lea.vmem [#allocation2], %s226
        %p228 = pneg %p164
        %p229 = pneg %p161
        %s230 = sand.u32 %s151, 1
        %s231 = scalar_lea.sflag [#allocation5], %s230
        %s232 = sand.u32 %s151, 1
        %s233 = scalar_lea.vmem [#allocation4], %s232
        %p234 = scmp.lt.s32.totalorder %s23, 1
        %s235 = scalar_select %p234, %s23, 1
        %s236 = smul.addr %s235, 54
        %s237 = smul.addr %s236, 8
        %s238 = scalar_lea.vmem %s0, %s237
        %p239 = scmp.lt.s32.totalorder %s23, 1
        %s240 = scalar_select %p239, %s23, 1
        %s241 = smul.addr %s240, 54
        %s242 = smul.addr %s241, 8
        %s243 = scalar_lea.vmem %s3, %s242
        %v245 = vld [vmem:[%s238] sm:$0xff]
        %v246 = vld [vmem:[%s238 + $0x8] sm:$0xff]
        %v247 = vld [vmem:[%s238 + $0x18] sm:$0xff]
        %v248 = vld [vmem:[%s238 + $0x20] sm:$0xff]
        %v249 = vld [vmem:[%s238 + $0x30] sm:$0xff]
        %v250 = vld [vmem:[%s238 + $0x38] sm:$0xff]
        %v251 = vld [vmem:[%s238 + $0x48] sm:$0xff]
        %v252 = vld [vmem:[%s238 + $0x50] sm:$0xff]
        %v253 = vld [vmem:[%s238 + $0x60] sm:$0xff]
        %v254 = vld [vmem:[%s238 + $0x68] sm:$0xff]
        %v255 = vld [vmem:[%s238 + $0x78] sm:$0xff]
        %v256 = vld [vmem:[%s238 + $0x80] sm:$0xff]
        %v257 = vld [vmem:[%s238 + $0x90] sm:$0xff]
        %v258 = vld [vmem:[%s238 + $0x98] sm:$0xff]
        %v259 = vld [vmem:[%s238 + $0xa8] sm:$0xff]
        %v260 = vld [vmem:[%s238 + $0xb0] sm:$0xff]
        %v261 = vld [vmem:[%s238 + $0xc0] sm:$0xff]
        %v262 = vld [vmem:[%s238 + $0xc8] sm:$0xff]
        %v263 = vld [vmem:[%s238 + $0xd8] sm:$0xff]
        %v264 = vld [vmem:[%s238 + $0xe0] sm:$0xff]
        %v265 = vld [vmem:[%s238 + $0xf0] sm:$0xff]
        %v266 = vld [vmem:[%s238 + $0xf8] sm:$0xff]
        %v267 = vld [vmem:[%s238 + $0x108] sm:$0xff]
        %v268 = vld [vmem:[%s238 + $0x110] sm:$0xff]
        %v269 = vld [vmem:[%s238 + $0x120] sm:$0xff]
        %v270 = vld [vmem:[%s238 + $0x128] sm:$0xff]
        %v271 = vld [vmem:[%s238 + $0x138] sm:$0xff]
        %v272 = vld [vmem:[%s238 + $0x140] sm:$0xff]
        %v273 = vld [vmem:[%s238 + $0x150] sm:$0xff]
        %v274 = vld [vmem:[%s238 + $0x158] sm:$0xff]
        %v275 = vld [vmem:[%s238 + $0x168] sm:$0xff]
        %v276 = vld [vmem:[%s238 + $0x170] sm:$0xff]
        %v277 = vpack.c.bf16 %v246, %v245
        %v278 = vpack.c.bf16 %v248, %v247
        %v279 = vpack.c.bf16 %v250, %v249
        %v280 = vpack.c.bf16 %v252, %v251
        %v281 = vpack.c.bf16 %v254, %v253
        %v282 = vpack.c.bf16 %v256, %v255
        %v283 = vpack.c.bf16 %v258, %v257
        %v284 = vpack.c.bf16 %v260, %v259
        %v285 = vpack.c.bf16 %v262, %v261
        %v286 = vpack.c.bf16 %v264, %v263
        %v287 = vpack.c.bf16 %v266, %v265
        %v288 = vpack.c.bf16 %v268, %v267
        %v289 = vpack.c.bf16 %v270, %v269
        %v290 = vpack.c.bf16 %v272, %v271
        %v291 = vpack.c.bf16 %v274, %v273
        %v292 = vpack.c.bf16 %v276, %v275
        %v293 = vld [vmem:[%s1] sm:$0x3]
        %v294 = vld [vmem:[%s238 + $0x1] sm:$0xff]
        %v295 = vld [vmem:[%s238 + $0x9] sm:$0xff]
        %v296 = vld [vmem:[%s238 + $0x19] sm:$0xff]
        %v297 = vld [vmem:[%s238 + $0x21] sm:$0xff]
        %v298 = vld [vmem:[%s238 + $0x31] sm:$0xff]
        %v299 = vld [vmem:[%s238 + $0x39] sm:$0xff]
        %v300 = vld [vmem:[%s238 + $0x49] sm:$0xff]
        %v301 = vld [vmem:[%s238 + $0x51] sm:$0xff]
        %v302 = vld [vmem:[%s238 + $0x61] sm:$0xff]
        %v303 = vld [vmem:[%s238 + $0x69] sm:$0xff]
        %v304 = vld [vmem:[%s238 + $0x79] sm:$0xff]
        %v305 = vld [vmem:[%s238 + $0x81] sm:$0xff]
        %v306 = vld [vmem:[%s238 + $0x91] sm:$0xff]
        %v307 = vld [vmem:[%s238 + $0x99] sm:$0xff]
        %v308 = vld [vmem:[%s238 + $0xa9] sm:$0xff]
        %v309 = vld [vmem:[%s238 + $0xb1] sm:$0xff]
        %v310 = vld [vmem:[%s238 + $0xc1] sm:$0xff]
        %v311 = vld [vmem:[%s238 + $0xc9] sm:$0xff]
        %v312 = vld [vmem:[%s238 + $0xd9] sm:$0xff]
        %v313 = vld [vmem:[%s238 + $0xe1] sm:$0xff]
        %v314 = vld [vmem:[%s238 + $0xf1] sm:$0xff]
        %v315 = vld [vmem:[%s238 + $0xf9] sm:$0xff]
        %v316 = vld [vmem:[%s238 + $0x109] sm:$0xff]
        %v317 = vld [vmem:[%s238 + $0x111] sm:$0xff]
        %v318 = vld [vmem:[%s238 + $0x121] sm:$0xff]
        %v319 = vld [vmem:[%s238 + $0x129] sm:$0xff]
        %v320 = vld [vmem:[%s238 + $0x139] sm:$0xff]
        %v321 = vld [vmem:[%s238 + $0x141] sm:$0xff]
        %v322 = vld [vmem:[%s238 + $0x151] sm:$0xff]
        %v323 = vld [vmem:[%s238 + $0x159] sm:$0xff]
        %v324 = vld [vmem:[%s238 + $0x169] sm:$0xff]
        %v325 = vld [vmem:[%s238 + $0x171] sm:$0xff]
        %v326 = vpack.c.bf16 %v295, %v294
        %v327 = vpack.c.bf16 %v297, %v296
        %v328 = vpack.c.bf16 %v299, %v298
        %v329 = vpack.c.bf16 %v301, %v300
        %v330 = vpack.c.bf16 %v303, %v302
        %v331 = vpack.c.bf16 %v305, %v304
        %v332 = vpack.c.bf16 %v307, %v306
        %v333 = vpack.c.bf16 %v309, %v308
        %v334 = vpack.c.bf16 %v311, %v310
        %v335 = vpack.c.bf16 %v313, %v312
        %v336 = vpack.c.bf16 %v315, %v314
        %v337 = vpack.c.bf16 %v317, %v316
        %v338 = vpack.c.bf16 %v319, %v318
        %v339 = vpack.c.bf16 %v321, %v320
        %v340 = vpack.c.bf16 %v323, %v322
        %v341 = vpack.c.bf16 %v325, %v324
        %s342 = scalar_lea.vmem %s1, 2
        %v343 = vld [vmem:[%s342] sm:$0x3]
        %vm344 = vcmask 31744
        %v346 = vsel %vm344, %v326, 0
        %v349 = vsel %vm344, %v327, 0
        %v352 = vsel %vm344, %v328, 0
        %v355 = vsel %vm344, %v329, 0
        %v358 = vsel %vm344, %v330, 0
        %v361 = vsel %vm344, %v331, 0
        %v364 = vsel %vm344, %v332, 0
        %v367 = vsel %vm344, %v333, 0
        %v370 = vsel %vm344, %v334, 0
        %v373 = vsel %vm344, %v335, 0
        %v376 = vsel %vm344, %v336, 0
        %v379 = vsel %vm344, %v337, 0
        %v382 = vsel %vm344, %v338, 0
        %v385 = vsel %vm344, %v339, 0
        %v388 = vsel %vm344, %v340, 0
        %v391 = vsel %vm344, %v341, 0
        %vm393 = vcmask 1041408
        %v395 = vsel %vm393, %v343, 0
        %397 = vmatpush.bf16.msra.mxu0 0
        %398 = vmatpush.bf16.msra.mxu0 0
        %399 = vmatpush.bf16.msra.mxu0 0
        %400 = vmatpush.bf16.msra.mxu0 0
        %401 = vmatpush.bf16.msra.mxu0 0
        %402 = vmatpush.bf16.msra.mxu0 0
        %403 = vmatpush.bf16.msra.mxu0 0
        %404 = vmatpush.bf16.msra.mxu0 %v395
        %405 = vmatmul.bf16.gmra.mxu0 %v346
        %v406 = vpop.f32.mrf.mxu0
        %v407 = vadd.f32 0.0, %v406
        %v408 = vpop.f32.mrf.mxu0
        %v409 = vadd.f32 0.0, %v408
        %410 = vmatmul.bf16.gmra.mxu0 %v349
        %v411 = vpop.f32.mrf.mxu0
        %v412 = vadd.f32 0.0, %v411
        %v413 = vpop.f32.mrf.mxu0
        %v414 = vadd.f32 0.0, %v413
        %415 = vmatmul.bf16.gmra.mxu0 %v352
        %v416 = vpop.f32.mrf.mxu0
        %v417 = vadd.f32 0.0, %v416
        %v418 = vpop.f32.mrf.mxu0
        %v419 = vadd.f32 0.0, %v418
        %420 = vmatmul.bf16.gmra.mxu0 %v355
        %v421 = vpop.f32.mrf.mxu0
        %v422 = vadd.f32 0.0, %v421
        %v423 = vpop.f32.mrf.mxu0
        %v424 = vadd.f32 0.0, %v423
        %425 = vmatmul.bf16.gmra.mxu0 %v358
        %v426 = vpop.f32.mrf.mxu0
        %v427 = vadd.f32 0.0, %v426
        %v428 = vpop.f32.mrf.mxu0
        %v429 = vadd.f32 0.0, %v428
        %430 = vmatmul.bf16.gmra.mxu0 %v361
        %v431 = vpop.f32.mrf.mxu0
        %v432 = vadd.f32 0.0, %v431
        %v433 = vpop.f32.mrf.mxu0
        %v434 = vadd.f32 0.0, %v433
        %435 = vmatmul.bf16.gmra.mxu0 %v364
        %v436 = vpop.f32.mrf.mxu0
        %v437 = vadd.f32 0.0, %v436
        %v438 = vpop.f32.mrf.mxu0
        %v439 = vadd.f32 0.0, %v438
        %440 = vmatmul.bf16.gmra.mxu0 %v367
        %v441 = vpop.f32.mrf.mxu0
        %v442 = vadd.f32 0.0, %v441
        %v443 = vpop.f32.mrf.mxu0
        %v444 = vadd.f32 0.0, %v443
        %445 = vmatmul.bf16.gmra.mxu0 %v370
        %v446 = vpop.f32.mrf.mxu0
        %v447 = vadd.f32 0.0, %v446
        %v448 = vpop.f32.mrf.mxu0
        %v449 = vadd.f32 0.0, %v448
        %450 = vmatmul.bf16.gmra.mxu0 %v373
        %v451 = vpop.f32.mrf.mxu0
        %v452 = vadd.f32 0.0, %v451
        %v453 = vpop.f32.mrf.mxu0
        %v454 = vadd.f32 0.0, %v453
        %455 = vmatmul.bf16.gmra.mxu0 %v376
        %v456 = vpop.f32.mrf.mxu0
        %v457 = vadd.f32 0.0, %v456
        %v458 = vpop.f32.mrf.mxu0
        %v459 = vadd.f32 0.0, %v458
        %460 = vmatmul.bf16.gmra.mxu0 %v379
        %v461 = vpop.f32.mrf.mxu0
        %v462 = vadd.f32 0.0, %v461
        %v463 = vpop.f32.mrf.mxu0
        %v464 = vadd.f32 0.0, %v463
        %465 = vmatmul.bf16.gmra.mxu0 %v382
        %v466 = vpop.f32.mrf.mxu0
        %v467 = vadd.f32 0.0, %v466
        %v468 = vpop.f32.mrf.mxu0
        %v469 = vadd.f32 0.0, %v468
        %470 = vmatmul.bf16.gmra.mxu0 %v385
        %v471 = vpop.f32.mrf.mxu0
        %v472 = vadd.f32 0.0, %v471
        %v473 = vpop.f32.mrf.mxu0
        %v474 = vadd.f32 0.0, %v473
        %475 = vmatmul.bf16.gmra.mxu0 %v388
        %v476 = vpop.f32.mrf.mxu0
        %v477 = vadd.f32 0.0, %v476
        %v478 = vpop.f32.mrf.mxu0
        %v479 = vadd.f32 0.0, %v478
        %480 = vmatmul.bf16.gmra.mxu0 %v391
        %v481 = vpop.f32.mrf.mxu0
        %v482 = vadd.f32 0.0, %v481
        %v483 = vpop.f32.mrf.mxu0
        %v484 = vadd.f32 0.0, %v483
        %485 = vdwg.mxu0
        %v487 = vsel %vm344, %v277, 0
        %v490 = vsel %vm344, %v278, 0
        %v493 = vsel %vm344, %v279, 0
        %v496 = vsel %vm344, %v280, 0
        %v499 = vsel %vm344, %v281, 0
        %v502 = vsel %vm344, %v282, 0
        %v505 = vsel %vm344, %v283, 0
        %v508 = vsel %vm344, %v284, 0
        %v511 = vsel %vm344, %v285, 0
        %v514 = vsel %vm344, %v286, 0
        %v517 = vsel %vm344, %v287, 0
        %v520 = vsel %vm344, %v288, 0
        %v523 = vsel %vm344, %v289, 0
        %v526 = vsel %vm344, %v290, 0
        %v529 = vsel %vm344, %v291, 0
        %v532 = vsel %vm344, %v292, 0
        %v535 = vsel %vm393, %v293, 0
        %537 = vmatpush.bf16.msra.mxu0 0
        %538 = vmatpush.bf16.msra.mxu0 0
        %539 = vmatpush.bf16.msra.mxu0 0
        %540 = vmatpush.bf16.msra.mxu0 0
        %541 = vmatpush.bf16.msra.mxu0 0
        %542 = vmatpush.bf16.msra.mxu0 0
        %543 = vmatpush.bf16.msra.mxu0 0
        %544 = vmatpush.bf16.msra.mxu0 %v535
        %545 = vmatmul.bf16.gmra.mxu0 %v487
        %v546 = vpop.f32.mrf.mxu0
        %v547 = vadd.f32 %v407, %v546
        %v548 = vpop.f32.mrf.mxu0
        %v549 = vadd.f32 %v409, %v548
        %550 = vmatmul.bf16.gmra.mxu0 %v490
        %v551 = vpop.f32.mrf.mxu0
        %v552 = vadd.f32 %v412, %v551
        %v553 = vpop.f32.mrf.mxu0
        %v554 = vadd.f32 %v414, %v553
        %555 = vmatmul.bf16.gmra.mxu0 %v493
        %v556 = vpop.f32.mrf.mxu0
        %v557 = vadd.f32 %v417, %v556
        %v558 = vpop.f32.mrf.mxu0
        %v559 = vadd.f32 %v419, %v558
        %560 = vmatmul.bf16.gmra.mxu0 %v496
        %v561 = vpop.f32.mrf.mxu0
        %v562 = vadd.f32 %v422, %v561
        %v563 = vpop.f32.mrf.mxu0
        %v564 = vadd.f32 %v424, %v563
        %565 = vmatmul.bf16.gmra.mxu0 %v499
        %v566 = vpop.f32.mrf.mxu0
        %v567 = vadd.f32 %v427, %v566
        %v568 = vpop.f32.mrf.mxu0
        %v569 = vadd.f32 %v429, %v568
        %570 = vmatmul.bf16.gmra.mxu0 %v502
        %v571 = vpop.f32.mrf.mxu0
        %v572 = vadd.f32 %v432, %v571
        %v573 = vpop.f32.mrf.mxu0
        %v574 = vadd.f32 %v434, %v573
        %575 = vmatmul.bf16.gmra.mxu0 %v505
        %v576 = vpop.f32.mrf.mxu0
        %v577 = vadd.f32 %v437, %v576
        %v578 = vpop.f32.mrf.mxu0
        %v579 = vadd.f32 %v439, %v578
        %580 = vmatmul.bf16.gmra.mxu0 %v508
        %v581 = vpop.f32.mrf.mxu0
        %v582 = vadd.f32 %v442, %v581
        %v583 = vpop.f32.mrf.mxu0
        %v584 = vadd.f32 %v444, %v583
        %585 = vmatmul.bf16.gmra.mxu0 %v511
        %v586 = vpop.f32.mrf.mxu0
        %v587 = vadd.f32 %v447, %v586
        %v588 = vpop.f32.mrf.mxu0
        %v589 = vadd.f32 %v449, %v588
        %590 = vmatmul.bf16.gmra.mxu0 %v514
        %v591 = vpop.f32.mrf.mxu0
        %v592 = vadd.f32 %v452, %v591
        %v593 = vpop.f32.mrf.mxu0
        %v594 = vadd.f32 %v454, %v593
        %595 = vmatmul.bf16.gmra.mxu0 %v517
        %v596 = vpop.f32.mrf.mxu0
        %v597 = vadd.f32 %v457, %v596
        %v598 = vpop.f32.mrf.mxu0
        %v599 = vadd.f32 %v459, %v598
        %600 = vmatmul.bf16.gmra.mxu0 %v520
        %v601 = vpop.f32.mrf.mxu0
        %v602 = vadd.f32 %v462, %v601
        %v603 = vpop.f32.mrf.mxu0
        %v604 = vadd.f32 %v464, %v603
        %605 = vmatmul.bf16.gmra.mxu0 %v523
        %v606 = vpop.f32.mrf.mxu0
        %v607 = vadd.f32 %v467, %v606
        %v608 = vpop.f32.mrf.mxu0
        %v609 = vadd.f32 %v469, %v608
        %610 = vmatmul.bf16.gmra.mxu0 %v526
        %v611 = vpop.f32.mrf.mxu0
        %v612 = vadd.f32 %v472, %v611
        %v613 = vpop.f32.mrf.mxu0
        %v614 = vadd.f32 %v474, %v613
        %615 = vmatmul.bf16.gmra.mxu0 %v529
        %v616 = vpop.f32.mrf.mxu0
        %v617 = vadd.f32 %v477, %v616
        %v618 = vpop.f32.mrf.mxu0
        %v619 = vadd.f32 %v479, %v618
        %620 = vmatmul.bf16.gmra.mxu0 %v532
        %v621 = vpop.f32.mrf.mxu0
        %v622 = vadd.f32 %v482, %v621
        %v623 = vpop.f32.mrf.mxu0
        %v624 = vadd.f32 %v484, %v623
        %625 = vdwg.mxu0
        %v626 = vld [vmem:[%s238 + $0x2] sm:$0xff]
        %v627 = vld [vmem:[%s238 + $0xa] sm:$0xff]
        %v628 = vld [vmem:[%s238 + $0x1a] sm:$0xff]
        %v629 = vld [vmem:[%s238 + $0x22] sm:$0xff]
        %v630 = vld [vmem:[%s238 + $0x32] sm:$0xff]
        %v631 = vld [vmem:[%s238 + $0x3a] sm:$0xff]
        %v632 = vld [vmem:[%s238 + $0x4a] sm:$0xff]
        %v633 = vld [vmem:[%s238 + $0x52] sm:$0xff]
        %v634 = vld [vmem:[%s238 + $0x62] sm:$0xff]
        %v635 = vld [vmem:[%s238 + $0x6a] sm:$0xff]
        %v636 = vld [vmem:[%s238 + $0x7a] sm:$0xff]
        %v637 = vld [vmem:[%s238 + $0x82] sm:$0xff]
        %v638 = vld [vmem:[%s238 + $0x92] sm:$0xff]
        %v639 = vld [vmem:[%s238 + $0x9a] sm:$0xff]
        %v640 = vld [vmem:[%s238 + $0xaa] sm:$0xff]
        %v641 = vld [vmem:[%s238 + $0xb2] sm:$0xff]
        %v642 = vld [vmem:[%s238 + $0xc2] sm:$0xff]
        %v643 = vld [vmem:[%s238 + $0xca] sm:$0xff]
        %v644 = vld [vmem:[%s238 + $0xda] sm:$0xff]
        %v645 = vld [vmem:[%s238 + $0xe2] sm:$0xff]
        %v646 = vld [vmem:[%s238 + $0xf2] sm:$0xff]
        %v647 = vld [vmem:[%s238 + $0xfa] sm:$0xff]
        %v648 = vld [vmem:[%s238 + $0x10a] sm:$0xff]
        %v649 = vld [vmem:[%s238 + $0x112] sm:$0xff]
        %v650 = vld [vmem:[%s238 + $0x122] sm:$0xff]
        %v651 = vld [vmem:[%s238 + $0x12a] sm:$0xff]
        %v652 = vld [vmem:[%s238 + $0x13a] sm:$0xff]
        %v653 = vld [vmem:[%s238 + $0x142] sm:$0xff]
        %v654 = vld [vmem:[%s238 + $0x152] sm:$0xff]
        %v655 = vld [vmem:[%s238 + $0x15a] sm:$0xff]
        %v656 = vld [vmem:[%s238 + $0x16a] sm:$0xff]
        %v657 = vld [vmem:[%s238 + $0x172] sm:$0xff]
        %v658 = vpack.c.bf16 %v627, %v626
        %v659 = vpack.c.bf16 %v629, %v628
        %v660 = vpack.c.bf16 %v631, %v630
        %v661 = vpack.c.bf16 %v633, %v632
        %v662 = vpack.c.bf16 %v635, %v634
        %v663 = vpack.c.bf16 %v637, %v636
        %v664 = vpack.c.bf16 %v639, %v638
        %v665 = vpack.c.bf16 %v641, %v640
        %v666 = vpack.c.bf16 %v643, %v642
        %v667 = vpack.c.bf16 %v645, %v644
        %v668 = vpack.c.bf16 %v647, %v646
        %v669 = vpack.c.bf16 %v649, %v648
        %v670 = vpack.c.bf16 %v651, %v650
        %v671 = vpack.c.bf16 %v653, %v652
        %v672 = vpack.c.bf16 %v655, %v654
        %v673 = vpack.c.bf16 %v657, %v656
        %s674 = scalar_lea.vmem %s1, 4
        %v675 = vld [vmem:[%s674] sm:$0x3]
        %v677 = vsel %vm344, %v658, 0
        %v680 = vsel %vm344, %v659, 0
        %v683 = vsel %vm344, %v660, 0
        %v686 = vsel %vm344, %v661, 0
        %v689 = vsel %vm344, %v662, 0
        %v692 = vsel %vm344, %v663, 0
        %v695 = vsel %vm344, %v664, 0
        %v698 = vsel %vm344, %v665, 0
        %v701 = vsel %vm344, %v666, 0
        %v704 = vsel %vm344, %v667, 0
        %v707 = vsel %vm344, %v668, 0
        %v710 = vsel %vm344, %v669, 0
        %v713 = vsel %vm344, %v670, 0
        %v716 = vsel %vm344, %v671, 0
        %v719 = vsel %vm344, %v672, 0
        %v722 = vsel %vm344, %v673, 0
        %v725 = vsel %vm393, %v675, 0
        %727 = vmatpush.bf16.msra.mxu0 0
        %728 = vmatpush.bf16.msra.mxu0 0
        %729 = vmatpush.bf16.msra.mxu0 0
        %730 = vmatpush.bf16.msra.mxu0 0
        %731 = vmatpush.bf16.msra.mxu0 0
        %732 = vmatpush.bf16.msra.mxu0 0
        %733 = vmatpush.bf16.msra.mxu0 0
        %734 = vmatpush.bf16.msra.mxu0 %v725
        %735 = vmatmul.bf16.gmra.mxu0 %v677
        %v736 = vpop.f32.mrf.mxu0
        %v737 = vadd.f32 0.0, %v736
        %v738 = vpop.f32.mrf.mxu0
        %v739 = vadd.f32 0.0, %v738
        %740 = vmatmul.bf16.gmra.mxu0 %v680
        %v741 = vpop.f32.mrf.mxu0
        %v742 = vadd.f32 0.0, %v741
        %v743 = vpop.f32.mrf.mxu0
        %v744 = vadd.f32 0.0, %v743
        %745 = vmatmul.bf16.gmra.mxu0 %v683
        %v746 = vpop.f32.mrf.mxu0
        %v747 = vadd.f32 0.0, %v746
        %v748 = vpop.f32.mrf.mxu0
        %v749 = vadd.f32 0.0, %v748
        %750 = vmatmul.bf16.gmra.mxu0 %v686
        %v751 = vpop.f32.mrf.mxu0
        %v752 = vadd.f32 0.0, %v751
        %v753 = vpop.f32.mrf.mxu0
        %v754 = vadd.f32 0.0, %v753
        %755 = vmatmul.bf16.gmra.mxu0 %v689
        %v756 = vpop.f32.mrf.mxu0
        %v757 = vadd.f32 0.0, %v756
        %v758 = vpop.f32.mrf.mxu0
        %v759 = vadd.f32 0.0, %v758
        %760 = vmatmul.bf16.gmra.mxu0 %v692
        %v761 = vpop.f32.mrf.mxu0
        %v762 = vadd.f32 0.0, %v761
        %v763 = vpop.f32.mrf.mxu0
        %v764 = vadd.f32 0.0, %v763
        %765 = vmatmul.bf16.gmra.mxu0 %v695
        %v766 = vpop.f32.mrf.mxu0
        %v767 = vadd.f32 0.0, %v766
        %v768 = vpop.f32.mrf.mxu0
        %v769 = vadd.f32 0.0, %v768
        %770 = vmatmul.bf16.gmra.mxu0 %v698
        %v771 = vpop.f32.mrf.mxu0
        %v772 = vadd.f32 0.0, %v771
        %v773 = vpop.f32.mrf.mxu0
        %v774 = vadd.f32 0.0, %v773
        %775 = vmatmul.bf16.gmra.mxu0 %v701
        %v776 = vpop.f32.mrf.mxu0
        %v777 = vadd.f32 0.0, %v776
        %v778 = vpop.f32.mrf.mxu0
        %v779 = vadd.f32 0.0, %v778
        %780 = vmatmul.bf16.gmra.mxu0 %v704
        %v781 = vpop.f32.mrf.mxu0
        %v782 = vadd.f32 0.0, %v781
        %v783 = vpop.f32.mrf.mxu0
        %v784 = vadd.f32 0.0, %v783
        %785 = vmatmul.bf16.gmra.mxu0 %v707
        %v786 = vpop.f32.mrf.mxu0
        %v787 = vadd.f32 0.0, %v786
        %v788 = vpop.f32.mrf.mxu0
        %v789 = vadd.f32 0.0, %v788
        %790 = vmatmul.bf16.gmra.mxu0 %v710
        %v791 = vpop.f32.mrf.mxu0
        %v792 = vadd.f32 0.0, %v791
        %v793 = vpop.f32.mrf.mxu0
        %v794 = vadd.f32 0.0, %v793
        %795 = vmatmul.bf16.gmra.mxu0 %v713
        %v796 = vpop.f32.mrf.mxu0
        %v797 = vadd.f32 0.0, %v796
        %v798 = vpop.f32.mrf.mxu0
        %v799 = vadd.f32 0.0, %v798
        %800 = vmatmul.bf16.gmra.mxu0 %v716
        %v801 = vpop.f32.mrf.mxu0
        %v802 = vadd.f32 0.0, %v801
        %v803 = vpop.f32.mrf.mxu0
        %v804 = vadd.f32 0.0, %v803
        %805 = vmatmul.bf16.gmra.mxu0 %v719
        %v806 = vpop.f32.mrf.mxu0
        %v807 = vadd.f32 0.0, %v806
        %v808 = vpop.f32.mrf.mxu0
        %v809 = vadd.f32 0.0, %v808
        %810 = vmatmul.bf16.gmra.mxu0 %v722
        %v811 = vpop.f32.mrf.mxu0
        %v812 = vadd.f32 0.0, %v811
        %v813 = vpop.f32.mrf.mxu0
        %v814 = vadd.f32 0.0, %v813
        %815 = vdwg.mxu0
        %v816 = vadd.f32 %v547, %v737
        %v817 = vadd.f32 %v549, %v739
        %v818 = vadd.f32 %v552, %v742
        %v819 = vadd.f32 %v554, %v744
        %v820 = vadd.f32 %v557, %v747
        %v821 = vadd.f32 %v559, %v749
        %v822 = vadd.f32 %v562, %v752
        %v823 = vadd.f32 %v564, %v754
        %v824 = vadd.f32 %v567, %v757
        %v825 = vadd.f32 %v569, %v759
        %v826 = vadd.f32 %v572, %v762
        %v827 = vadd.f32 %v574, %v764
        %v828 = vadd.f32 %v577, %v767
        %v829 = vadd.f32 %v579, %v769
        %v830 = vadd.f32 %v582, %v772
        %v831 = vadd.f32 %v584, %v774
        %v832 = vadd.f32 %v587, %v777
        %v833 = vadd.f32 %v589, %v779
        %v834 = vadd.f32 %v592, %v782
        %v835 = vadd.f32 %v594, %v784
        %v836 = vadd.f32 %v597, %v787
        %v837 = vadd.f32 %v599, %v789
        %v838 = vadd.f32 %v602, %v792
        %v839 = vadd.f32 %v604, %v794
        %v840 = vadd.f32 %v607, %v797
        %v841 = vadd.f32 %v609, %v799
        %v842 = vadd.f32 %v612, %v802
        %v843 = vadd.f32 %v614, %v804
        %v844 = vadd.f32 %v617, %v807
        %v845 = vadd.f32 %v619, %v809
        %v846 = vadd.f32 %v622, %v812
        %v847 = vadd.f32 %v624, %v814
        %s848 = scalar_lea.vmem %s238, 24
        %v849 = vld [vmem:[%s848] sm:$0xff]
        %v850 = vld [vmem:[%s848 + $0x8] sm:$0xff]
        %v851 = vld [vmem:[%s848 + $0x18] sm:$0xff]
        %v852 = vld [vmem:[%s848 + $0x20] sm:$0xff]
        %v853 = vld [vmem:[%s848 + $0x30] sm:$0xff]
        %v854 = vld [vmem:[%s848 + $0x38] sm:$0xff]
        %v855 = vld [vmem:[%s848 + $0x48] sm:$0xff]
        %v856 = vld [vmem:[%s848 + $0x50] sm:$0xff]
        %v857 = vld [vmem:[%s848 + $0x60] sm:$0xff]
        %v858 = vld [vmem:[%s848 + $0x68] sm:$0xff]
        %v859 = vld [vmem:[%s848 + $0x78] sm:$0xff]
        %v860 = vld [vmem:[%s848 + $0x80] sm:$0xff]
        %v861 = vld [vmem:[%s848 + $0x90] sm:$0xff]
        %v862 = vld [vmem:[%s848 + $0x98] sm:$0xff]
        %v863 = vld [vmem:[%s848 + $0xa8] sm:$0xff]
        %v864 = vld [vmem:[%s848 + $0xb0] sm:$0xff]
        %v865 = vld [vmem:[%s848 + $0xc0] sm:$0xff]
        %v866 = vld [vmem:[%s848 + $0xc8] sm:$0xff]
        %v867 = vld [vmem:[%s848 + $0xd8] sm:$0xff]
        %v868 = vld [vmem:[%s848 + $0xe0] sm:$0xff]
        %v869 = vld [vmem:[%s848 + $0xf0] sm:$0xff]
        %v870 = vld [vmem:[%s848 + $0xf8] sm:$0xff]
        %v871 = vld [vmem:[%s848 + $0x108] sm:$0xff]
        %v872 = vld [vmem:[%s848 + $0x110] sm:$0xff]
        %v873 = vld [vmem:[%s848 + $0x120] sm:$0xff]
        %v874 = vld [vmem:[%s848 + $0x128] sm:$0xff]
        %v875 = vld [vmem:[%s848 + $0x138] sm:$0xff]
        %v876 = vld [vmem:[%s848 + $0x140] sm:$0xff]
        %v877 = vld [vmem:[%s848 + $0x150] sm:$0xff]
        %v878 = vld [vmem:[%s848 + $0x158] sm:$0xff]
        %v879 = vld [vmem:[%s848 + $0x168] sm:$0xff]
        %v880 = vld [vmem:[%s848 + $0x170] sm:$0xff]
        %v881 = vpack.c.bf16 %v850, %v849
        %v882 = vpack.c.bf16 %v852, %v851
        %v883 = vpack.c.bf16 %v854, %v853
        %v884 = vpack.c.bf16 %v856, %v855
        %v885 = vpack.c.bf16 %v858, %v857
        %v886 = vpack.c.bf16 %v860, %v859
        %v887 = vpack.c.bf16 %v862, %v861
        %v888 = vpack.c.bf16 %v864, %v863
        %v889 = vpack.c.bf16 %v866, %v865
        %v890 = vpack.c.bf16 %v868, %v867
        %v891 = vpack.c.bf16 %v870, %v869
        %v892 = vpack.c.bf16 %v872, %v871
        %v893 = vpack.c.bf16 %v874, %v873
        %v894 = vpack.c.bf16 %v876, %v875
        %v895 = vpack.c.bf16 %v878, %v877
        %v896 = vpack.c.bf16 %v880, %v879
        %s897 = scalar_lea.vmem %s1, 6
        %v898 = vld [vmem:[%s897] sm:$0x3]
        %v900 = vsel %vm344, %v881, 0
        %v903 = vsel %vm344, %v882, 0
        %v906 = vsel %vm344, %v883, 0
        %v909 = vsel %vm344, %v884, 0
        %v912 = vsel %vm344, %v885, 0
        %v915 = vsel %vm344, %v886, 0
        %v918 = vsel %vm344, %v887, 0
        %v921 = vsel %vm344, %v888, 0
        %v924 = vsel %vm344, %v889, 0
        %v927 = vsel %vm344, %v890, 0
        %v930 = vsel %vm344, %v891, 0
        %v933 = vsel %vm344, %v892, 0
        %v936 = vsel %vm344, %v893, 0
        %v939 = vsel %vm344, %v894, 0
        %v942 = vsel %vm344, %v895, 0
        %v945 = vsel %vm344, %v896, 0
        %v948 = vsel %vm393, %v898, 0
        %950 = vmatpush.bf16.msra.mxu0 0
        %951 = vmatpush.bf16.msra.mxu0 0
        %952 = vmatpush.bf16.msra.mxu0 0
        %953 = vmatpush.bf16.msra.mxu0 0
        %954 = vmatpush.bf16.msra.mxu0 0
        %955 = vmatpush.bf16.msra.mxu0 0
        %956 = vmatpush.bf16.msra.mxu0 0
        %957 = vmatpush.bf16.msra.mxu0 %v948
        %958 = vmatmul.bf16.gmra.mxu0 %v900
        %v959 = vpop.f32.mrf.mxu0
        %v960 = vadd.f32 0.0, %v959
        %v961 = vpop.f32.mrf.mxu0
        %v962 = vadd.f32 0.0, %v961
        %963 = vmatmul.bf16.gmra.mxu0 %v903
        %v964 = vpop.f32.mrf.mxu0
        %v965 = vadd.f32 0.0, %v964
        %v966 = vpop.f32.mrf.mxu0
        %v967 = vadd.f32 0.0, %v966
        %968 = vmatmul.bf16.gmra.mxu0 %v906
        %v969 = vpop.f32.mrf.mxu0
        %v970 = vadd.f32 0.0, %v969
        %v971 = vpop.f32.mrf.mxu0
        %v972 = vadd.f32 0.0, %v971
        %973 = vmatmul.bf16.gmra.mxu0 %v909
        %v974 = vpop.f32.mrf.mxu0
        %v975 = vadd.f32 0.0, %v974
        %v976 = vpop.f32.mrf.mxu0
        %v977 = vadd.f32 0.0, %v976
        %978 = vmatmul.bf16.gmra.mxu0 %v912
        %v979 = vpop.f32.mrf.mxu0
        %v980 = vadd.f32 0.0, %v979
        %v981 = vpop.f32.mrf.mxu0
        %v982 = vadd.f32 0.0, %v981
        %983 = vmatmul.bf16.gmra.mxu0 %v915
        %v984 = vpop.f32.mrf.mxu0
        %v985 = vadd.f32 0.0, %v984
        %v986 = vpop.f32.mrf.mxu0
        %v987 = vadd.f32 0.0, %v986
        %988 = vmatmul.bf16.gmra.mxu0 %v918
        %v989 = vpop.f32.mrf.mxu0
        %v990 = vadd.f32 0.0, %v989
        %v991 = vpop.f32.mrf.mxu0
        %v992 = vadd.f32 0.0, %v991
        %993 = vmatmul.bf16.gmra.mxu0 %v921
        %v994 = vpop.f32.mrf.mxu0
        %v995 = vadd.f32 0.0, %v994
        %v996 = vpop.f32.mrf.mxu0
        %v997 = vadd.f32 0.0, %v996
        %998 = vmatmul.bf16.gmra.mxu0 %v924
        %v999 = vpop.f32.mrf.mxu0
        %v1000 = vadd.f32 0.0, %v999
        %v1001 = vpop.f32.mrf.mxu0
        %v1002 = vadd.f32 0.0, %v1001
        %1003 = vmatmul.bf16.gmra.mxu0 %v927
        %v1004 = vpop.f32.mrf.mxu0
        %v1005 = vadd.f32 0.0, %v1004
        %v1006 = vpop.f32.mrf.mxu0
        %v1007 = vadd.f32 0.0, %v1006
        %1008 = vmatmul.bf16.gmra.mxu0 %v930
        %v1009 = vpop.f32.mrf.mxu0
        %v1010 = vadd.f32 0.0, %v1009
        %v1011 = vpop.f32.mrf.mxu0
        %v1012 = vadd.f32 0.0, %v1011
        %1013 = vmatmul.bf16.gmra.mxu0 %v933
        %v1014 = vpop.f32.mrf.mxu0
        %v1015 = vadd.f32 0.0, %v1014
        %v1016 = vpop.f32.mrf.mxu0
        %v1017 = vadd.f32 0.0, %v1016
        %1018 = vmatmul.bf16.gmra.mxu0 %v936
        %v1019 = vpop.f32.mrf.mxu0
        %v1020 = vadd.f32 0.0, %v1019
        %v1021 = vpop.f32.mrf.mxu0
        %v1022 = vadd.f32 0.0, %v1021
        %1023 = vmatmul.bf16.gmra.mxu0 %v939
        %v1024 = vpop.f32.mrf.mxu0
        %v1025 = vadd.f32 0.0, %v1024
        %v1026 = vpop.f32.mrf.mxu0
        %v1027 = vadd.f32 0.0, %v1026
        %1028 = vmatmul.bf16.gmra.mxu0 %v942
        %v1029 = vpop.f32.mrf.mxu0
        %v1030 = vadd.f32 0.0, %v1029
        %v1031 = vpop.f32.mrf.mxu0
        %v1032 = vadd.f32 0.0, %v1031
        %1033 = vmatmul.bf16.gmra.mxu0 %v945
        %v1034 = vpop.f32.mrf.mxu0
        %v1035 = vadd.f32 0.0, %v1034
        %v1036 = vpop.f32.mrf.mxu0
        %v1037 = vadd.f32 0.0, %v1036
        %1038 = vdwg.mxu0
        %v1039 = vadd.f32 %v816, %v960
        %v1040 = vadd.f32 %v817, %v962
        %v1041 = vadd.f32 %v818, %v965
        %v1042 = vadd.f32 %v819, %v967
        %v1043 = vadd.f32 %v820, %v970
        %v1044 = vadd.f32 %v821, %v972
        %v1045 = vadd.f32 %v822, %v975
        %v1046 = vadd.f32 %v823, %v977
        %v1047 = vadd.f32 %v824, %v980
        %v1048 = vadd.f32 %v825, %v982
        %v1049 = vadd.f32 %v826, %v985
        %v1050 = vadd.f32 %v827, %v987
        %v1051 = vadd.f32 %v828, %v990
        %v1052 = vadd.f32 %v829, %v992
        %v1053 = vadd.f32 %v830, %v995
        %v1054 = vadd.f32 %v831, %v997
        %v1055 = vadd.f32 %v832, %v1000
        %v1056 = vadd.f32 %v833, %v1002
        %v1057 = vadd.f32 %v834, %v1005
        %v1058 = vadd.f32 %v835, %v1007
        %v1059 = vadd.f32 %v836, %v1010
        %v1060 = vadd.f32 %v837, %v1012
        %v1061 = vadd.f32 %v838, %v1015
        %v1062 = vadd.f32 %v839, %v1017
        %v1063 = vadd.f32 %v840, %v1020
        %v1064 = vadd.f32 %v841, %v1022
        %v1065 = vadd.f32 %v842, %v1025
        %v1066 = vadd.f32 %v843, %v1027
        %v1067 = vadd.f32 %v844, %v1030
        %v1068 = vadd.f32 %v845, %v1032
        %v1069 = vadd.f32 %v846, %v1035
        %v1070 = vadd.f32 %v847, %v1037
        %v1071 = vld [vmem:[%s848 + $0x1] sm:$0xff]
        %v1072 = vld [vmem:[%s848 + $0x9] sm:$0xff]
        %v1073 = vld [vmem:[%s848 + $0x19] sm:$0xff]
        %v1074 = vld [vmem:[%s848 + $0x21] sm:$0xff]
        %v1075 = vld [vmem:[%s848 + $0x31] sm:$0xff]
        %v1076 = vld [vmem:[%s848 + $0x39] sm:$0xff]
        %v1077 = vld [vmem:[%s848 + $0x49] sm:$0xff]
        %v1078 = vld [vmem:[%s848 + $0x51] sm:$0xff]
        %v1079 = vld [vmem:[%s848 + $0x61] sm:$0xff]
        %v1080 = vld [vmem:[%s848 + $0x69] sm:$0xff]
        %v1081 = vld [vmem:[%s848 + $0x79] sm:$0xff]
        %v1082 = vld [vmem:[%s848 + $0x81] sm:$0xff]
        %v1083 = vld [vmem:[%s848 + $0x91] sm:$0xff]
        %v1084 = vld [vmem:[%s848 + $0x99] sm:$0xff]
        %v1085 = vld [vmem:[%s848 + $0xa9] sm:$0xff]
        %v1086 = vld [vmem:[%s848 + $0xb1] sm:$0xff]
        %v1087 = vld [vmem:[%s848 + $0xc1] sm:$0xff]
        %v1088 = vld [vmem:[%s848 + $0xc9] sm:$0xff]
        %v1089 = vld [vmem:[%s848 + $0xd9] sm:$0xff]
        %v1090 = vld [vmem:[%s848 + $0xe1] sm:$0xff]
        %v1091 = vld [vmem:[%s848 + $0xf1] sm:$0xff]
        %v1092 = vld [vmem:[%s848 + $0xf9] sm:$0xff]
        %v1093 = vld [vmem:[%s848 + $0x109] sm:$0xff]
        %v1094 = vld [vmem:[%s848 + $0x111] sm:$0xff]
        %v1095 = vld [vmem:[%s848 + $0x121] sm:$0xff]
        %v1096 = vld [vmem:[%s848 + $0x129] sm:$0xff]
        %v1097 = vld [vmem:[%s848 + $0x139] sm:$0xff]
        %v1098 = vld [vmem:[%s848 + $0x141] sm:$0xff]
        %v1099 = vld [vmem:[%s848 + $0x151] sm:$0xff]
        %v1100 = vld [vmem:[%s848 + $0x159] sm:$0xff]
        %v1101 = vld [vmem:[%s848 + $0x169] sm:$0xff]
        %v1102 = vld [vmem:[%s848 + $0x171] sm:$0xff]
        %v1103 = vpack.c.bf16 %v1072, %v1071
        %v1104 = vpack.c.bf16 %v1074, %v1073
        %v1105 = vpack.c.bf16 %v1076, %v1075
        %v1106 = vpack.c.bf16 %v1078, %v1077
        %v1107 = vpack.c.bf16 %v1080, %v1079
        %v1108 = vpack.c.bf16 %v1082, %v1081
        %v1109 = vpack.c.bf16 %v1084, %v1083
        %v1110 = vpack.c.bf16 %v1086, %v1085
        %v1111 = vpack.c.bf16 %v1088, %v1087
        %v1112 = vpack.c.bf16 %v1090, %v1089
        %v1113 = vpack.c.bf16 %v1092, %v1091
        %v1114 = vpack.c.bf16 %v1094, %v1093
        %v1115 = vpack.c.bf16 %v1096, %v1095
        %v1116 = vpack.c.bf16 %v1098, %v1097
        %v1117 = vpack.c.bf16 %v1100, %v1099
        %v1118 = vpack.c.bf16 %v1102, %v1101
        %s1119 = scalar_lea.vmem %s1, 8
        %v1120 = vld [vmem:[%s1119] sm:$0x3]
        %v1122 = vsel %vm344, %v1103, 0
        %v1125 = vsel %vm344, %v1104, 0
        %v1128 = vsel %vm344, %v1105, 0
        %v1131 = vsel %vm344, %v1106, 0
        %v1134 = vsel %vm344, %v1107, 0
        %v1137 = vsel %vm344, %v1108, 0
        %v1140 = vsel %vm344, %v1109, 0
        %v1143 = vsel %vm344, %v1110, 0
        %v1146 = vsel %vm344, %v1111, 0
        %v1149 = vsel %vm344, %v1112, 0
        %v1152 = vsel %vm344, %v1113, 0
        %v1155 = vsel %vm344, %v1114, 0
        %v1158 = vsel %vm344, %v1115, 0
        %v1161 = vsel %vm344, %v1116, 0
        %v1164 = vsel %vm344, %v1117, 0
        %v1167 = vsel %vm344, %v1118, 0
        %v1170 = vsel %vm393, %v1120, 0
        %1172 = vmatpush.bf16.msra.mxu0 0
        %1173 = vmatpush.bf16.msra.mxu0 0
        %1174 = vmatpush.bf16.msra.mxu0 0
        %1175 = vmatpush.bf16.msra.mxu0 0
        %1176 = vmatpush.bf16.msra.mxu0 0
        %1177 = vmatpush.bf16.msra.mxu0 0
        %1178 = vmatpush.bf16.msra.mxu0 0
        %1179 = vmatpush.bf16.msra.mxu0 %v1170
        %1180 = vmatmul.bf16.gmra.mxu0 %v1122
        %v1181 = vpop.f32.mrf.mxu0
        %v1182 = vadd.f32 0.0, %v1181
        %v1183 = vpop.f32.mrf.mxu0
        %v1184 = vadd.f32 0.0, %v1183
        %1185 = vmatmul.bf16.gmra.mxu0 %v1125
        %v1186 = vpop.f32.mrf.mxu0
        %v1187 = vadd.f32 0.0, %v1186
        %v1188 = vpop.f32.mrf.mxu0
        %v1189 = vadd.f32 0.0, %v1188
        %1190 = vmatmul.bf16.gmra.mxu0 %v1128
        %v1191 = vpop.f32.mrf.mxu0
        %v1192 = vadd.f32 0.0, %v1191
        %v1193 = vpop.f32.mrf.mxu0
        %v1194 = vadd.f32 0.0, %v1193
        %1195 = vmatmul.bf16.gmra.mxu0 %v1131
        %v1196 = vpop.f32.mrf.mxu0
        %v1197 = vadd.f32 0.0, %v1196
        %v1198 = vpop.f32.mrf.mxu0
        %v1199 = vadd.f32 0.0, %v1198
        %1200 = vmatmul.bf16.gmra.mxu0 %v1134
        %v1201 = vpop.f32.mrf.mxu0
        %v1202 = vadd.f32 0.0, %v1201
        %v1203 = vpop.f32.mrf.mxu0
        %v1204 = vadd.f32 0.0, %v1203
        %1205 = vmatmul.bf16.gmra.mxu0 %v1137
        %v1206 = vpop.f32.mrf.mxu0
        %v1207 = vadd.f32 0.0, %v1206
        %v1208 = vpop.f32.mrf.mxu0
        %v1209 = vadd.f32 0.0, %v1208
        %1210 = vmatmul.bf16.gmra.mxu0 %v1140
        %v1211 = vpop.f32.mrf.mxu0
        %v1212 = vadd.f32 0.0, %v1211
        %v1213 = vpop.f32.mrf.mxu0
        %v1214 = vadd.f32 0.0, %v1213
        %1215 = vmatmul.bf16.gmra.mxu0 %v1143
        %v1216 = vpop.f32.mrf.mxu0
        %v1217 = vadd.f32 0.0, %v1216
        %v1218 = vpop.f32.mrf.mxu0
        %v1219 = vadd.f32 0.0, %v1218
        %1220 = vmatmul.bf16.gmra.mxu0 %v1146
        %v1221 = vpop.f32.mrf.mxu0
        %v1222 = vadd.f32 0.0, %v1221
        %v1223 = vpop.f32.mrf.mxu0
        %v1224 = vadd.f32 0.0, %v1223
        %1225 = vmatmul.bf16.gmra.mxu0 %v1149
        %v1226 = vpop.f32.mrf.mxu0
        %v1227 = vadd.f32 0.0, %v1226
        %v1228 = vpop.f32.mrf.mxu0
        %v1229 = vadd.f32 0.0, %v1228
        %1230 = vmatmul.bf16.gmra.mxu0 %v1152
        %v1231 = vpop.f32.mrf.mxu0
        %v1232 = vadd.f32 0.0, %v1231
        %v1233 = vpop.f32.mrf.mxu0
        %v1234 = vadd.f32 0.0, %v1233
        %1235 = vmatmul.bf16.gmra.mxu0 %v1155
        %v1236 = vpop.f32.mrf.mxu0
        %v1237 = vadd.f32 0.0, %v1236
        %v1238 = vpop.f32.mrf.mxu0
        %v1239 = vadd.f32 0.0, %v1238
        %1240 = vmatmul.bf16.gmra.mxu0 %v1158
        %v1241 = vpop.f32.mrf.mxu0
        %v1242 = vadd.f32 0.0, %v1241
        %v1243 = vpop.f32.mrf.mxu0
        %v1244 = vadd.f32 0.0, %v1243
        %1245 = vmatmul.bf16.gmra.mxu0 %v1161
        %v1246 = vpop.f32.mrf.mxu0
        %v1247 = vadd.f32 0.0, %v1246
        %v1248 = vpop.f32.mrf.mxu0
        %v1249 = vadd.f32 0.0, %v1248
        %1250 = vmatmul.bf16.gmra.mxu0 %v1164
        %v1251 = vpop.f32.mrf.mxu0
        %v1252 = vadd.f32 0.0, %v1251
        %v1253 = vpop.f32.mrf.mxu0
        %v1254 = vadd.f32 0.0, %v1253
        %1255 = vmatmul.bf16.gmra.mxu0 %v1167
        %v1256 = vpop.f32.mrf.mxu0
        %v1257 = vadd.f32 0.0, %v1256
        %v1258 = vpop.f32.mrf.mxu0
        %v1259 = vadd.f32 0.0, %v1258
        %1260 = vdwg.mxu0
        %v1261 = vadd.f32 %v1039, %v1182
        %v1262 = vadd.f32 %v1040, %v1184
        %v1263 = vadd.f32 %v1041, %v1187
        %v1264 = vadd.f32 %v1042, %v1189
        %v1265 = vadd.f32 %v1043, %v1192
        %v1266 = vadd.f32 %v1044, %v1194
        %v1267 = vadd.f32 %v1045, %v1197
        %v1268 = vadd.f32 %v1046, %v1199
        %v1269 = vadd.f32 %v1047, %v1202
        %v1270 = vadd.f32 %v1048, %v1204
        %v1271 = vadd.f32 %v1049, %v1207
        %v1272 = vadd.f32 %v1050, %v1209
        %v1273 = vadd.f32 %v1051, %v1212
        %v1274 = vadd.f32 %v1052, %v1214
        %v1275 = vadd.f32 %v1053, %v1217
        %v1276 = vadd.f32 %v1054, %v1219
        %v1277 = vadd.f32 %v1055, %v1222
        %v1278 = vadd.f32 %v1056, %v1224
        %v1279 = vadd.f32 %v1057, %v1227
        %v1280 = vadd.f32 %v1058, %v1229
        %v1281 = vadd.f32 %v1059, %v1232
        %v1282 = vadd.f32 %v1060, %v1234
        %v1283 = vadd.f32 %v1061, %v1237
        %v1284 = vadd.f32 %v1062, %v1239
        %v1285 = vadd.f32 %v1063, %v1242
        %v1286 = vadd.f32 %v1064, %v1244
        %v1287 = vadd.f32 %v1065, %v1247
        %v1288 = vadd.f32 %v1066, %v1249
        %v1289 = vadd.f32 %v1067, %v1252
        %v1290 = vadd.f32 %v1068, %v1254
        %v1291 = vadd.f32 %v1069, %v1257
        %v1292 = vadd.f32 %v1070, %v1259
        %v1293 = vld [vmem:[%s848 + $0x2] sm:$0xff]
        %v1294 = vld [vmem:[%s848 + $0xa] sm:$0xff]
        %v1295 = vld [vmem:[%s848 + $0x1a] sm:$0xff]
        %v1296 = vld [vmem:[%s848 + $0x22] sm:$0xff]
        %v1297 = vld [vmem:[%s848 + $0x32] sm:$0xff]
        %v1298 = vld [vmem:[%s848 + $0x3a] sm:$0xff]
        %v1299 = vld [vmem:[%s848 + $0x4a] sm:$0xff]
        %v1300 = vld [vmem:[%s848 + $0x52] sm:$0xff]
        %v1301 = vld [vmem:[%s848 + $0x62] sm:$0xff]
        %v1302 = vld [vmem:[%s848 + $0x6a] sm:$0xff]
        %v1303 = vld [vmem:[%s848 + $0x7a] sm:$0xff]
        %v1304 = vld [vmem:[%s848 + $0x82] sm:$0xff]
        %v1305 = vld [vmem:[%s848 + $0x92] sm:$0xff]
        %v1306 = vld [vmem:[%s848 + $0x9a] sm:$0xff]
        %v1307 = vld [vmem:[%s848 + $0xaa] sm:$0xff]
        %v1308 = vld [vmem:[%s848 + $0xb2] sm:$0xff]
        %v1309 = vld [vmem:[%s848 + $0xc2] sm:$0xff]
        %v1310 = vld [vmem:[%s848 + $0xca] sm:$0xff]
        %v1311 = vld [vmem:[%s848 + $0xda] sm:$0xff]
        %v1312 = vld [vmem:[%s848 + $0xe2] sm:$0xff]
        %v1313 = vld [vmem:[%s848 + $0xf2] sm:$0xff]
        %v1314 = vld [vmem:[%s848 + $0xfa] sm:$0xff]
        %v1315 = vld [vmem:[%s848 + $0x10a] sm:$0xff]
        %v1316 = vld [vmem:[%s848 + $0x112] sm:$0xff]
        %v1317 = vld [vmem:[%s848 + $0x122] sm:$0xff]
        %v1318 = vld [vmem:[%s848 + $0x12a] sm:$0xff]
        %v1319 = vld [vmem:[%s848 + $0x13a] sm:$0xff]
        %v1320 = vld [vmem:[%s848 + $0x142] sm:$0xff]
        %v1321 = vld [vmem:[%s848 + $0x152] sm:$0xff]
        %v1322 = vld [vmem:[%s848 + $0x15a] sm:$0xff]
        %v1323 = vld [vmem:[%s848 + $0x16a] sm:$0xff]
        %v1324 = vld [vmem:[%s848 + $0x172] sm:$0xff]
        %v1325 = vpack.c.bf16 %v1294, %v1293
        %v1326 = vpack.c.bf16 %v1296, %v1295
        %v1327 = vpack.c.bf16 %v1298, %v1297
        %v1328 = vpack.c.bf16 %v1300, %v1299
        %v1329 = vpack.c.bf16 %v1302, %v1301
        %v1330 = vpack.c.bf16 %v1304, %v1303
        %v1331 = vpack.c.bf16 %v1306, %v1305
        %v1332 = vpack.c.bf16 %v1308, %v1307
        %v1333 = vpack.c.bf16 %v1310, %v1309
        %v1334 = vpack.c.bf16 %v1312, %v1311
        %v1335 = vpack.c.bf16 %v1314, %v1313
        %v1336 = vpack.c.bf16 %v1316, %v1315
        %v1337 = vpack.c.bf16 %v1318, %v1317
        %v1338 = vpack.c.bf16 %v1320, %v1319
        %v1339 = vpack.c.bf16 %v1322, %v1321
        %v1340 = vpack.c.bf16 %v1324, %v1323
        %s1341 = scalar_lea.vmem %s1, 10
        %v1342 = vld [vmem:[%s1341] sm:$0x3]
        %v1344 = vsel %vm344, %v1325, 0
        %v1347 = vsel %vm344, %v1326, 0
        %v1350 = vsel %vm344, %v1327, 0
        %v1353 = vsel %vm344, %v1328, 0
        %v1356 = vsel %vm344, %v1329, 0
        %v1359 = vsel %vm344, %v1330, 0
        %v1362 = vsel %vm344, %v1331, 0
        %v1365 = vsel %vm344, %v1332, 0
        %v1368 = vsel %vm344, %v1333, 0
        %v1371 = vsel %vm344, %v1334, 0
        %v1374 = vsel %vm344, %v1335, 0
        %v1377 = vsel %vm344, %v1336, 0
        %v1380 = vsel %vm344, %v1337, 0
        %v1383 = vsel %vm344, %v1338, 0
        %v1386 = vsel %vm344, %v1339, 0
        %v1389 = vsel %vm344, %v1340, 0
        %v1392 = vsel %vm393, %v1342, 0
        %1394 = vmatpush.bf16.msra.mxu0 0
        %1395 = vmatpush.bf16.msra.mxu0 0
        %1396 = vmatpush.bf16.msra.mxu0 0
        %1397 = vmatpush.bf16.msra.mxu0 0
        %1398 = vmatpush.bf16.msra.mxu0 0
        %1399 = vmatpush.bf16.msra.mxu0 0
        %1400 = vmatpush.bf16.msra.mxu0 0
        %1401 = vmatpush.bf16.msra.mxu0 %v1392
        %1402 = vmatmul.bf16.gmra.mxu0 %v1344
        %v1403 = vpop.f32.mrf.mxu0
        %v1404 = vadd.f32 0.0, %v1403
        %v1405 = vpop.f32.mrf.mxu0
        %v1406 = vadd.f32 0.0, %v1405
        %1407 = vmatmul.bf16.gmra.mxu0 %v1347
        %v1408 = vpop.f32.mrf.mxu0
        %v1409 = vadd.f32 0.0, %v1408
        %v1410 = vpop.f32.mrf.mxu0
        %v1411 = vadd.f32 0.0, %v1410
        %1412 = vmatmul.bf16.gmra.mxu0 %v1350
        %v1413 = vpop.f32.mrf.mxu0
        %v1414 = vadd.f32 0.0, %v1413
        %v1415 = vpop.f32.mrf.mxu0
        %v1416 = vadd.f32 0.0, %v1415
        %1417 = vmatmul.bf16.gmra.mxu0 %v1353
        %v1418 = vpop.f32.mrf.mxu0
        %v1419 = vadd.f32 0.0, %v1418
        %v1420 = vpop.f32.mrf.mxu0
        %v1421 = vadd.f32 0.0, %v1420
        %1422 = vmatmul.bf16.gmra.mxu0 %v1356
        %v1423 = vpop.f32.mrf.mxu0
        %v1424 = vadd.f32 0.0, %v1423
        %v1425 = vpop.f32.mrf.mxu0
        %v1426 = vadd.f32 0.0, %v1425
        %1427 = vmatmul.bf16.gmra.mxu0 %v1359
        %v1428 = vpop.f32.mrf.mxu0
        %v1429 = vadd.f32 0.0, %v1428
        %v1430 = vpop.f32.mrf.mxu0
        %v1431 = vadd.f32 0.0, %v1430
        %1432 = vmatmul.bf16.gmra.mxu0 %v1362
        %v1433 = vpop.f32.mrf.mxu0
        %v1434 = vadd.f32 0.0, %v1433
        %v1435 = vpop.f32.mrf.mxu0
        %v1436 = vadd.f32 0.0, %v1435
        %1437 = vmatmul.bf16.gmra.mxu0 %v1365
        %v1438 = vpop.f32.mrf.mxu0
        %v1439 = vadd.f32 0.0, %v1438
        %v1440 = vpop.f32.mrf.mxu0
        %v1441 = vadd.f32 0.0, %v1440
        %1442 = vmatmul.bf16.gmra.mxu0 %v1368
        %v1443 = vpop.f32.mrf.mxu0
        %v1444 = vadd.f32 0.0, %v1443
        %v1445 = vpop.f32.mrf.mxu0
        %v1446 = vadd.f32 0.0, %v1445
        %1447 = vmatmul.bf16.gmra.mxu0 %v1371
        %v1448 = vpop.f32.mrf.mxu0
        %v1449 = vadd.f32 0.0, %v1448
        %v1450 = vpop.f32.mrf.mxu0
        %v1451 = vadd.f32 0.0, %v1450
        %1452 = vmatmul.bf16.gmra.mxu0 %v1374
        %v1453 = vpop.f32.mrf.mxu0
        %v1454 = vadd.f32 0.0, %v1453
        %v1455 = vpop.f32.mrf.mxu0
        %v1456 = vadd.f32 0.0, %v1455
        %1457 = vmatmul.bf16.gmra.mxu0 %v1377
        %v1458 = vpop.f32.mrf.mxu0
        %v1459 = vadd.f32 0.0, %v1458
        %v1460 = vpop.f32.mrf.mxu0
        %v1461 = vadd.f32 0.0, %v1460
        %1462 = vmatmul.bf16.gmra.mxu0 %v1380
        %v1463 = vpop.f32.mrf.mxu0
        %v1464 = vadd.f32 0.0, %v1463
        %v1465 = vpop.f32.mrf.mxu0
        %v1466 = vadd.f32 0.0, %v1465
        %1467 = vmatmul.bf16.gmra.mxu0 %v1383
        %v1468 = vpop.f32.mrf.mxu0
        %v1469 = vadd.f32 0.0, %v1468
        %v1470 = vpop.f32.mrf.mxu0
        %v1471 = vadd.f32 0.0, %v1470
        %1472 = vmatmul.bf16.gmra.mxu0 %v1386
        %v1473 = vpop.f32.mrf.mxu0
        %v1474 = vadd.f32 0.0, %v1473
        %v1475 = vpop.f32.mrf.mxu0
        %v1476 = vadd.f32 0.0, %v1475
        %1477 = vmatmul.bf16.gmra.mxu0 %v1389
        %v1478 = vpop.f32.mrf.mxu0
        %v1479 = vadd.f32 0.0, %v1478
        %v1480 = vpop.f32.mrf.mxu0
        %v1481 = vadd.f32 0.0, %v1480
        %1482 = vdwg.mxu0
        %v1483 = vadd.f32 %v1261, %v1404
        %v1484 = vadd.f32 %v1262, %v1406
        %v1485 = vadd.f32 %v1263, %v1409
        %v1486 = vadd.f32 %v1264, %v1411
        %v1487 = vadd.f32 %v1265, %v1414
        %v1488 = vadd.f32 %v1266, %v1416
        %v1489 = vadd.f32 %v1267, %v1419
        %v1490 = vadd.f32 %v1268, %v1421
        %v1491 = vadd.f32 %v1269, %v1424
        %v1492 = vadd.f32 %v1270, %v1426
        %v1493 = vadd.f32 %v1271, %v1429
        %v1494 = vadd.f32 %v1272, %v1431
        %v1495 = vadd.f32 %v1273, %v1434
        %v1496 = vadd.f32 %v1274, %v1436
        %v1497 = vadd.f32 %v1275, %v1439
        %v1498 = vadd.f32 %v1276, %v1441
        %v1499 = vadd.f32 %v1277, %v1444
        %v1500 = vadd.f32 %v1278, %v1446
        %v1501 = vadd.f32 %v1279, %v1449
        %v1502 = vadd.f32 %v1280, %v1451
        %v1503 = vadd.f32 %v1281, %v1454
        %v1504 = vadd.f32 %v1282, %v1456
        %v1505 = vadd.f32 %v1283, %v1459
        %v1506 = vadd.f32 %v1284, %v1461
        %v1507 = vadd.f32 %v1285, %v1464
        %v1508 = vadd.f32 %v1286, %v1466
        %v1509 = vadd.f32 %v1287, %v1469
        %v1510 = vadd.f32 %v1288, %v1471
        %v1511 = vadd.f32 %v1289, %v1474
        %v1512 = vadd.f32 %v1290, %v1476
        %v1513 = vadd.f32 %v1291, %v1479
        %v1514 = vadd.f32 %v1292, %v1481
        %s1515 = scalar_lea.vmem %s238, 48
        %v1516 = vld [vmem:[%s1515] sm:$0xff]
        %v1517 = vld [vmem:[%s1515 + $0x8] sm:$0xff]
        %v1518 = vld [vmem:[%s1515 + $0x18] sm:$0xff]
        %v1519 = vld [vmem:[%s1515 + $0x20] sm:$0xff]
        %v1520 = vld [vmem:[%s1515 + $0x30] sm:$0xff]
        %v1521 = vld [vmem:[%s1515 + $0x38] sm:$0xff]
        %v1522 = vld [vmem:[%s1515 + $0x48] sm:$0xff]
        %v1523 = vld [vmem:[%s1515 + $0x50] sm:$0xff]
        %v1524 = vld [vmem:[%s1515 + $0x60] sm:$0xff]
        %v1525 = vld [vmem:[%s1515 + $0x68] sm:$0xff]
        %v1526 = vld [vmem:[%s1515 + $0x78] sm:$0xff]
        %v1527 = vld [vmem:[%s1515 + $0x80] sm:$0xff]
        %v1528 = vld [vmem:[%s1515 + $0x90] sm:$0xff]
        %v1529 = vld [vmem:[%s1515 + $0x98] sm:$0xff]
        %v1530 = vld [vmem:[%s1515 + $0xa8] sm:$0xff]
        %v1531 = vld [vmem:[%s1515 + $0xb0] sm:$0xff]
        %v1532 = vld [vmem:[%s1515 + $0xc0] sm:$0xff]
        %v1533 = vld [vmem:[%s1515 + $0xc8] sm:$0xff]
        %v1534 = vld [vmem:[%s1515 + $0xd8] sm:$0xff]
        %v1535 = vld [vmem:[%s1515 + $0xe0] sm:$0xff]
        %v1536 = vld [vmem:[%s1515 + $0xf0] sm:$0xff]
        %v1537 = vld [vmem:[%s1515 + $0xf8] sm:$0xff]
        %v1538 = vld [vmem:[%s1515 + $0x108] sm:$0xff]
        %v1539 = vld [vmem:[%s1515 + $0x110] sm:$0xff]
        %v1540 = vld [vmem:[%s1515 + $0x120] sm:$0xff]
        %v1541 = vld [vmem:[%s1515 + $0x128] sm:$0xff]
        %v1542 = vld [vmem:[%s1515 + $0x138] sm:$0xff]
        %v1543 = vld [vmem:[%s1515 + $0x140] sm:$0xff]
        %v1544 = vld [vmem:[%s1515 + $0x150] sm:$0xff]
        %v1545 = vld [vmem:[%s1515 + $0x158] sm:$0xff]
        %v1546 = vld [vmem:[%s1515 + $0x168] sm:$0xff]
        %v1547 = vld [vmem:[%s1515 + $0x170] sm:$0xff]
        %v1548 = vpack.c.bf16 %v1517, %v1516
        %v1549 = vpack.c.bf16 %v1519, %v1518
        %v1550 = vpack.c.bf16 %v1521, %v1520
        %v1551 = vpack.c.bf16 %v1523, %v1522
        %v1552 = vpack.c.bf16 %v1525, %v1524
        %v1553 = vpack.c.bf16 %v1527, %v1526
        %v1554 = vpack.c.bf16 %v1529, %v1528
        %v1555 = vpack.c.bf16 %v1531, %v1530
        %v1556 = vpack.c.bf16 %v1533, %v1532
        %v1557 = vpack.c.bf16 %v1535, %v1534
        %v1558 = vpack.c.bf16 %v1537, %v1536
        %v1559 = vpack.c.bf16 %v1539, %v1538
        %v1560 = vpack.c.bf16 %v1541, %v1540
        %v1561 = vpack.c.bf16 %v1543, %v1542
        %v1562 = vpack.c.bf16 %v1545, %v1544
        %v1563 = vpack.c.bf16 %v1547, %v1546
        %s1564 = scalar_lea.vmem %s1, 12
        %v1565 = vld [vmem:[%s1564] sm:$0x3]
        %v1567 = vsel %vm344, %v1548, 0
        %v1570 = vsel %vm344, %v1549, 0
        %v1573 = vsel %vm344, %v1550, 0
        %v1576 = vsel %vm344, %v1551, 0
        %v1579 = vsel %vm344, %v1552, 0
        %v1582 = vsel %vm344, %v1553, 0
        %v1585 = vsel %vm344, %v1554, 0
        %v1588 = vsel %vm344, %v1555, 0
        %v1591 = vsel %vm344, %v1556, 0
        %v1594 = vsel %vm344, %v1557, 0
        %v1597 = vsel %vm344, %v1558, 0
        %v1600 = vsel %vm344, %v1559, 0
        %v1603 = vsel %vm344, %v1560, 0
        %v1606 = vsel %vm344, %v1561, 0
        %v1609 = vsel %vm344, %v1562, 0
        %v1612 = vsel %vm344, %v1563, 0
        %v1615 = vsel %vm393, %v1565, 0
        %1617 = vmatpush.bf16.msra.mxu0 0
        %1618 = vmatpush.bf16.msra.mxu0 0
        %1619 = vmatpush.bf16.msra.mxu0 0
        %1620 = vmatpush.bf16.msra.mxu0 0
        %1621 = vmatpush.bf16.msra.mxu0 0
        %1622 = vmatpush.bf16.msra.mxu0 0
        %1623 = vmatpush.bf16.msra.mxu0 0
        %1624 = vmatpush.bf16.msra.mxu0 %v1615
        %1625 = vmatmul.bf16.gmra.mxu0 %v1567
        %v1626 = vpop.f32.mrf.mxu0
        %v1627 = vadd.f32 0.0, %v1626
        %v1628 = vpop.f32.mrf.mxu0
        %v1629 = vadd.f32 0.0, %v1628
        %1630 = vmatmul.bf16.gmra.mxu0 %v1570
        %v1631 = vpop.f32.mrf.mxu0
        %v1632 = vadd.f32 0.0, %v1631
        %v1633 = vpop.f32.mrf.mxu0
        %v1634 = vadd.f32 0.0, %v1633
        %1635 = vmatmul.bf16.gmra.mxu0 %v1573
        %v1636 = vpop.f32.mrf.mxu0
        %v1637 = vadd.f32 0.0, %v1636
        %v1638 = vpop.f32.mrf.mxu0
        %v1639 = vadd.f32 0.0, %v1638
        %1640 = vmatmul.bf16.gmra.mxu0 %v1576
        %v1641 = vpop.f32.mrf.mxu0
        %v1642 = vadd.f32 0.0, %v1641
        %v1643 = vpop.f32.mrf.mxu0
        %v1644 = vadd.f32 0.0, %v1643
        %1645 = vmatmul.bf16.gmra.mxu0 %v1579
        %v1646 = vpop.f32.mrf.mxu0
        %v1647 = vadd.f32 0.0, %v1646
        %v1648 = vpop.f32.mrf.mxu0
        %v1649 = vadd.f32 0.0, %v1648
        %1650 = vmatmul.bf16.gmra.mxu0 %v1582
        %v1651 = vpop.f32.mrf.mxu0
        %v1652 = vadd.f32 0.0, %v1651
        %v1653 = vpop.f32.mrf.mxu0
        %v1654 = vadd.f32 0.0, %v1653
        %1655 = vmatmul.bf16.gmra.mxu0 %v1585
        %v1656 = vpop.f32.mrf.mxu0
        %v1657 = vadd.f32 0.0, %v1656
        %v1658 = vpop.f32.mrf.mxu0
        %v1659 = vadd.f32 0.0, %v1658
        %1660 = vmatmul.bf16.gmra.mxu0 %v1588
        %v1661 = vpop.f32.mrf.mxu0
        %v1662 = vadd.f32 0.0, %v1661
        %v1663 = vpop.f32.mrf.mxu0
        %v1664 = vadd.f32 0.0, %v1663
        %1665 = vmatmul.bf16.gmra.mxu0 %v1591
        %v1666 = vpop.f32.mrf.mxu0
        %v1667 = vadd.f32 0.0, %v1666
        %v1668 = vpop.f32.mrf.mxu0
        %v1669 = vadd.f32 0.0, %v1668
        %1670 = vmatmul.bf16.gmra.mxu0 %v1594
        %v1671 = vpop.f32.mrf.mxu0
        %v1672 = vadd.f32 0.0, %v1671
        %v1673 = vpop.f32.mrf.mxu0
        %v1674 = vadd.f32 0.0, %v1673
        %1675 = vmatmul.bf16.gmra.mxu0 %v1597
        %v1676 = vpop.f32.mrf.mxu0
        %v1677 = vadd.f32 0.0, %v1676
        %v1678 = vpop.f32.mrf.mxu0
        %v1679 = vadd.f32 0.0, %v1678
        %1680 = vmatmul.bf16.gmra.mxu0 %v1600
        %v1681 = vpop.f32.mrf.mxu0
        %v1682 = vadd.f32 0.0, %v1681
        %v1683 = vpop.f32.mrf.mxu0
        %v1684 = vadd.f32 0.0, %v1683
        %1685 = vmatmul.bf16.gmra.mxu0 %v1603
        %v1686 = vpop.f32.mrf.mxu0
        %v1687 = vadd.f32 0.0, %v1686
        %v1688 = vpop.f32.mrf.mxu0
        %v1689 = vadd.f32 0.0, %v1688
        %1690 = vmatmul.bf16.gmra.mxu0 %v1606
        %v1691 = vpop.f32.mrf.mxu0
        %v1692 = vadd.f32 0.0, %v1691
        %v1693 = vpop.f32.mrf.mxu0
        %v1694 = vadd.f32 0.0, %v1693
        %1695 = vmatmul.bf16.gmra.mxu0 %v1609
        %v1696 = vpop.f32.mrf.mxu0
        %v1697 = vadd.f32 0.0, %v1696
        %v1698 = vpop.f32.mrf.mxu0
        %v1699 = vadd.f32 0.0, %v1698
        %1700 = vmatmul.bf16.gmra.mxu0 %v1612
        %v1701 = vpop.f32.mrf.mxu0
        %v1702 = vadd.f32 0.0, %v1701
        %v1703 = vpop.f32.mrf.mxu0
        %v1704 = vadd.f32 0.0, %v1703
        %1705 = vdwg.mxu0
        %v1706 = vadd.f32 %v1483, %v1627
        %v1707 = vadd.f32 %v1484, %v1629
        %v1708 = vadd.f32 %v1485, %v1632
        %v1709 = vadd.f32 %v1486, %v1634
        %v1710 = vadd.f32 %v1487, %v1637
        %v1711 = vadd.f32 %v1488, %v1639
        %v1712 = vadd.f32 %v1489, %v1642
        %v1713 = vadd.f32 %v1490, %v1644
        %v1714 = vadd.f32 %v1491, %v1647
        %v1715 = vadd.f32 %v1492, %v1649
        %v1716 = vadd.f32 %v1493, %v1652
        %v1717 = vadd.f32 %v1494, %v1654
        %v1718 = vadd.f32 %v1495, %v1657
        %v1719 = vadd.f32 %v1496, %v1659
        %v1720 = vadd.f32 %v1497, %v1662
        %v1721 = vadd.f32 %v1498, %v1664
        %v1722 = vadd.f32 %v1499, %v1667
        %v1723 = vadd.f32 %v1500, %v1669
        %v1724 = vadd.f32 %v1501, %v1672
        %v1725 = vadd.f32 %v1502, %v1674
        %v1726 = vadd.f32 %v1503, %v1677
        %v1727 = vadd.f32 %v1504, %v1679
        %v1728 = vadd.f32 %v1505, %v1682
        %v1729 = vadd.f32 %v1506, %v1684
        %v1730 = vadd.f32 %v1507, %v1687
        %v1731 = vadd.f32 %v1508, %v1689
        %v1732 = vadd.f32 %v1509, %v1692
        %v1733 = vadd.f32 %v1510, %v1694
        %v1734 = vadd.f32 %v1511, %v1697
        %v1735 = vadd.f32 %v1512, %v1699
        %v1736 = vadd.f32 %v1513, %v1702
        %v1737 = vadd.f32 %v1514, %v1704
        %v1738 = vld [vmem:[%s1515 + $0x1] sm:$0xff]
        %v1739 = vld [vmem:[%s1515 + $0x9] sm:$0xff]
        %v1740 = vld [vmem:[%s1515 + $0x19] sm:$0xff]
        %v1741 = vld [vmem:[%s1515 + $0x21] sm:$0xff]
        %v1742 = vld [vmem:[%s1515 + $0x31] sm:$0xff]
        %v1743 = vld [vmem:[%s1515 + $0x39] sm:$0xff]
        %v1744 = vld [vmem:[%s1515 + $0x49] sm:$0xff]
        %v1745 = vld [vmem:[%s1515 + $0x51] sm:$0xff]
        %v1746 = vld [vmem:[%s1515 + $0x61] sm:$0xff]
        %v1747 = vld [vmem:[%s1515 + $0x69] sm:$0xff]
        %v1748 = vld [vmem:[%s1515 + $0x79] sm:$0xff]
        %v1749 = vld [vmem:[%s1515 + $0x81] sm:$0xff]
        %v1750 = vld [vmem:[%s1515 + $0x91] sm:$0xff]
        %v1751 = vld [vmem:[%s1515 + $0x99] sm:$0xff]
        %v1752 = vld [vmem:[%s1515 + $0xa9] sm:$0xff]
        %v1753 = vld [vmem:[%s1515 + $0xb1] sm:$0xff]
        %v1754 = vld [vmem:[%s1515 + $0xc1] sm:$0xff]
        %v1755 = vld [vmem:[%s1515 + $0xc9] sm:$0xff]
        %v1756 = vld [vmem:[%s1515 + $0xd9] sm:$0xff]
        %v1757 = vld [vmem:[%s1515 + $0xe1] sm:$0xff]
        %v1758 = vld [vmem:[%s1515 + $0xf1] sm:$0xff]
        %v1759 = vld [vmem:[%s1515 + $0xf9] sm:$0xff]
        %v1760 = vld [vmem:[%s1515 + $0x109] sm:$0xff]
        %v1761 = vld [vmem:[%s1515 + $0x111] sm:$0xff]
        %v1762 = vld [vmem:[%s1515 + $0x121] sm:$0xff]
        %v1763 = vld [vmem:[%s1515 + $0x129] sm:$0xff]
        %v1764 = vld [vmem:[%s1515 + $0x139] sm:$0xff]
        %v1765 = vld [vmem:[%s1515 + $0x141] sm:$0xff]
        %v1766 = vld [vmem:[%s1515 + $0x151] sm:$0xff]
        %v1767 = vld [vmem:[%s1515 + $0x159] sm:$0xff]
        %v1768 = vld [vmem:[%s1515 + $0x169] sm:$0xff]
        %v1769 = vld [vmem:[%s1515 + $0x171] sm:$0xff]
        %v1770 = vpack.c.bf16 %v1739, %v1738
        %v1771 = vpack.c.bf16 %v1741, %v1740
        %v1772 = vpack.c.bf16 %v1743, %v1742
        %v1773 = vpack.c.bf16 %v1745, %v1744
        %v1774 = vpack.c.bf16 %v1747, %v1746
        %v1775 = vpack.c.bf16 %v1749, %v1748
        %v1776 = vpack.c.bf16 %v1751, %v1750
        %v1777 = vpack.c.bf16 %v1753, %v1752
        %v1778 = vpack.c.bf16 %v1755, %v1754
        %v1779 = vpack.c.bf16 %v1757, %v1756
        %v1780 = vpack.c.bf16 %v1759, %v1758
        %v1781 = vpack.c.bf16 %v1761, %v1760
        %v1782 = vpack.c.bf16 %v1763, %v1762
        %v1783 = vpack.c.bf16 %v1765, %v1764
        %v1784 = vpack.c.bf16 %v1767, %v1766
        %v1785 = vpack.c.bf16 %v1769, %v1768
        %s1786 = scalar_lea.vmem %s1, 14
        %v1787 = vld [vmem:[%s1786] sm:$0x3]
        %v1789 = vsel %vm344, %v1770, 0
        %v1792 = vsel %vm344, %v1771, 0
        %v1795 = vsel %vm344, %v1772, 0
        %v1798 = vsel %vm344, %v1773, 0
        %v1801 = vsel %vm344, %v1774, 0
        %v1804 = vsel %vm344, %v1775, 0
        %v1807 = vsel %vm344, %v1776, 0
        %v1810 = vsel %vm344, %v1777, 0
        %v1813 = vsel %vm344, %v1778, 0
        %v1816 = vsel %vm344, %v1779, 0
        %v1819 = vsel %vm344, %v1780, 0
        %v1822 = vsel %vm344, %v1781, 0
        %v1825 = vsel %vm344, %v1782, 0
        %v1828 = vsel %vm344, %v1783, 0
        %v1831 = vsel %vm344, %v1784, 0
        %v1834 = vsel %vm344, %v1785, 0
        %v1837 = vsel %vm393, %v1787, 0
        %1839 = vmatpush.bf16.msra.mxu0 0
        %1840 = vmatpush.bf16.msra.mxu0 0
        %1841 = vmatpush.bf16.msra.mxu0 0
        %1842 = vmatpush.bf16.msra.mxu0 0
        %1843 = vmatpush.bf16.msra.mxu0 0
        %1844 = vmatpush.bf16.msra.mxu0 0
        %1845 = vmatpush.bf16.msra.mxu0 0
        %1846 = vmatpush.bf16.msra.mxu0 %v1837
        %1847 = vmatmul.bf16.gmra.mxu0 %v1789
        %v1848 = vpop.f32.mrf.mxu0
        %v1849 = vadd.f32 0.0, %v1848
        %v1850 = vpop.f32.mrf.mxu0
        %v1851 = vadd.f32 0.0, %v1850
        %1852 = vmatmul.bf16.gmra.mxu0 %v1792
        %v1853 = vpop.f32.mrf.mxu0
        %v1854 = vadd.f32 0.0, %v1853
        %v1855 = vpop.f32.mrf.mxu0
        %v1856 = vadd.f32 0.0, %v1855
        %1857 = vmatmul.bf16.gmra.mxu0 %v1795
        %v1858 = vpop.f32.mrf.mxu0
        %v1859 = vadd.f32 0.0, %v1858
        %v1860 = vpop.f32.mrf.mxu0
        %v1861 = vadd.f32 0.0, %v1860
        %1862 = vmatmul.bf16.gmra.mxu0 %v1798
        %v1863 = vpop.f32.mrf.mxu0
        %v1864 = vadd.f32 0.0, %v1863
        %v1865 = vpop.f32.mrf.mxu0
        %v1866 = vadd.f32 0.0, %v1865
        %1867 = vmatmul.bf16.gmra.mxu0 %v1801
        %v1868 = vpop.f32.mrf.mxu0
        %v1869 = vadd.f32 0.0, %v1868
        %v1870 = vpop.f32.mrf.mxu0
        %v1871 = vadd.f32 0.0, %v1870
        %1872 = vmatmul.bf16.gmra.mxu0 %v1804
        %v1873 = vpop.f32.mrf.mxu0
        %v1874 = vadd.f32 0.0, %v1873
        %v1875 = vpop.f32.mrf.mxu0
        %v1876 = vadd.f32 0.0, %v1875
        %1877 = vmatmul.bf16.gmra.mxu0 %v1807
        %v1878 = vpop.f32.mrf.mxu0
        %v1879 = vadd.f32 0.0, %v1878
        %v1880 = vpop.f32.mrf.mxu0
        %v1881 = vadd.f32 0.0, %v1880
        %1882 = vmatmul.bf16.gmra.mxu0 %v1810
        %v1883 = vpop.f32.mrf.mxu0
        %v1884 = vadd.f32 0.0, %v1883
        %v1885 = vpop.f32.mrf.mxu0
        %v1886 = vadd.f32 0.0, %v1885
        %1887 = vmatmul.bf16.gmra.mxu0 %v1813
        %v1888 = vpop.f32.mrf.mxu0
        %v1889 = vadd.f32 0.0, %v1888
        %v1890 = vpop.f32.mrf.mxu0
        %v1891 = vadd.f32 0.0, %v1890
        %1892 = vmatmul.bf16.gmra.mxu0 %v1816
        %v1893 = vpop.f32.mrf.mxu0
        %v1894 = vadd.f32 0.0, %v1893
        %v1895 = vpop.f32.mrf.mxu0
        %v1896 = vadd.f32 0.0, %v1895
        %1897 = vmatmul.bf16.gmra.mxu0 %v1819
        %v1898 = vpop.f32.mrf.mxu0
        %v1899 = vadd.f32 0.0, %v1898
        %v1900 = vpop.f32.mrf.mxu0
        %v1901 = vadd.f32 0.0, %v1900
        %1902 = vmatmul.bf16.gmra.mxu0 %v1822
        %v1903 = vpop.f32.mrf.mxu0
        %v1904 = vadd.f32 0.0, %v1903
        %v1905 = vpop.f32.mrf.mxu0
        %v1906 = vadd.f32 0.0, %v1905
        %1907 = vmatmul.bf16.gmra.mxu0 %v1825
        %v1908 = vpop.f32.mrf.mxu0
        %v1909 = vadd.f32 0.0, %v1908
        %v1910 = vpop.f32.mrf.mxu0
        %v1911 = vadd.f32 0.0, %v1910
        %1912 = vmatmul.bf16.gmra.mxu0 %v1828
        %v1913 = vpop.f32.mrf.mxu0
        %v1914 = vadd.f32 0.0, %v1913
        %v1915 = vpop.f32.mrf.mxu0
        %v1916 = vadd.f32 0.0, %v1915
        %1917 = vmatmul.bf16.gmra.mxu0 %v1831
        %v1918 = vpop.f32.mrf.mxu0
        %v1919 = vadd.f32 0.0, %v1918
        %v1920 = vpop.f32.mrf.mxu0
        %v1921 = vadd.f32 0.0, %v1920
        %1922 = vmatmul.bf16.gmra.mxu0 %v1834
        %v1923 = vpop.f32.mrf.mxu0
        %v1924 = vadd.f32 0.0, %v1923
        %v1925 = vpop.f32.mrf.mxu0
        %v1926 = vadd.f32 0.0, %v1925
        %1927 = vdwg.mxu0
        %v1928 = vadd.f32 %v1706, %v1849
        %v1929 = vadd.f32 %v1707, %v1851
        %v1930 = vadd.f32 %v1708, %v1854
        %v1931 = vadd.f32 %v1709, %v1856
        %v1932 = vadd.f32 %v1710, %v1859
        %v1933 = vadd.f32 %v1711, %v1861
        %v1934 = vadd.f32 %v1712, %v1864
        %v1935 = vadd.f32 %v1713, %v1866
        %v1936 = vadd.f32 %v1714, %v1869
        %v1937 = vadd.f32 %v1715, %v1871
        %v1938 = vadd.f32 %v1716, %v1874
        %v1939 = vadd.f32 %v1717, %v1876
        %v1940 = vadd.f32 %v1718, %v1879
        %v1941 = vadd.f32 %v1719, %v1881
        %v1942 = vadd.f32 %v1720, %v1884
        %v1943 = vadd.f32 %v1721, %v1886
        %v1944 = vadd.f32 %v1722, %v1889
        %v1945 = vadd.f32 %v1723, %v1891
        %v1946 = vadd.f32 %v1724, %v1894
        %v1947 = vadd.f32 %v1725, %v1896
        %v1948 = vadd.f32 %v1726, %v1899
        %v1949 = vadd.f32 %v1727, %v1901
        %v1950 = vadd.f32 %v1728, %v1904
        %v1951 = vadd.f32 %v1729, %v1906
        %v1952 = vadd.f32 %v1730, %v1909
        %v1953 = vadd.f32 %v1731, %v1911
        %v1954 = vadd.f32 %v1732, %v1914
        %v1955 = vadd.f32 %v1733, %v1916
        %v1956 = vadd.f32 %v1734, %v1919
        %v1957 = vadd.f32 %v1735, %v1921
        %v1958 = vadd.f32 %v1736, %v1924
        %v1959 = vadd.f32 %v1737, %v1926
        %v1960 = vld [vmem:[%s1515 + $0x2] sm:$0xff]
        %v1961 = vld [vmem:[%s1515 + $0xa] sm:$0xff]
        %v1962 = vld [vmem:[%s1515 + $0x1a] sm:$0xff]
        %v1963 = vld [vmem:[%s1515 + $0x22] sm:$0xff]
        %v1964 = vld [vmem:[%s1515 + $0x32] sm:$0xff]
        %v1965 = vld [vmem:[%s1515 + $0x3a] sm:$0xff]
        %v1966 = vld [vmem:[%s1515 + $0x4a] sm:$0xff]
        %v1967 = vld [vmem:[%s1515 + $0x52] sm:$0xff]
        %v1968 = vld [vmem:[%s1515 + $0x62] sm:$0xff]
        %v1969 = vld [vmem:[%s1515 + $0x6a] sm:$0xff]
        %v1970 = vld [vmem:[%s1515 + $0x7a] sm:$0xff]
        %v1971 = vld [vmem:[%s1515 + $0x82] sm:$0xff]
        %v1972 = vld [vmem:[%s1515 + $0x92] sm:$0xff]
        %v1973 = vld [vmem:[%s1515 + $0x9a] sm:$0xff]
        %v1974 = vld [vmem:[%s1515 + $0xaa] sm:$0xff]
        %v1975 = vld [vmem:[%s1515 + $0xb2] sm:$0xff]
        %v1976 = vld [vmem:[%s1515 + $0xc2] sm:$0xff]
        %v1977 = vld [vmem:[%s1515 + $0xca] sm:$0xff]
        %v1978 = vld [vmem:[%s1515 + $0xda] sm:$0xff]
        %v1979 = vld [vmem:[%s1515 + $0xe2] sm:$0xff]
        %v1980 = vld [vmem:[%s1515 + $0xf2] sm:$0xff]
        %v1981 = vld [vmem:[%s1515 + $0xfa] sm:$0xff]
        %v1982 = vld [vmem:[%s1515 + $0x10a] sm:$0xff]
        %v1983 = vld [vmem:[%s1515 + $0x112] sm:$0xff]
        %v1984 = vld [vmem:[%s1515 + $0x122] sm:$0xff]
        %v1985 = vld [vmem:[%s1515 + $0x12a] sm:$0xff]
        %v1986 = vld [vmem:[%s1515 + $0x13a] sm:$0xff]
        %v1987 = vld [vmem:[%s1515 + $0x142] sm:$0xff]
        %v1988 = vld [vmem:[%s1515 + $0x152] sm:$0xff]
        %v1989 = vld [vmem:[%s1515 + $0x15a] sm:$0xff]
        %v1990 = vld [vmem:[%s1515 + $0x16a] sm:$0xff]
        %v1991 = vld [vmem:[%s1515 + $0x172] sm:$0xff]
        %v1992 = vpack.c.bf16 %v1961, %v1960
        %v1993 = vpack.c.bf16 %v1963, %v1962
        %v1994 = vpack.c.bf16 %v1965, %v1964
        %v1995 = vpack.c.bf16 %v1967, %v1966
        %v1996 = vpack.c.bf16 %v1969, %v1968
        %v1997 = vpack.c.bf16 %v1971, %v1970
        %v1998 = vpack.c.bf16 %v1973, %v1972
        %v1999 = vpack.c.bf16 %v1975, %v1974
        %v2000 = vpack.c.bf16 %v1977, %v1976
        %v2001 = vpack.c.bf16 %v1979, %v1978
        %v2002 = vpack.c.bf16 %v1981, %v1980
        %v2003 = vpack.c.bf16 %v1983, %v1982
        %v2004 = vpack.c.bf16 %v1985, %v1984
        %v2005 = vpack.c.bf16 %v1987, %v1986
        %v2006 = vpack.c.bf16 %v1989, %v1988
        %v2007 = vpack.c.bf16 %v1991, %v1990
        %s2008 = scalar_lea.vmem %s1, 16
        %v2009 = vld [vmem:[%s2008] sm:$0x3]
        %v2011 = vsel %vm344, %v1992, 0
        %v2014 = vsel %vm344, %v1993, 0
        %v2017 = vsel %vm344, %v1994, 0
        %v2020 = vsel %vm344, %v1995, 0
        %v2023 = vsel %vm344, %v1996, 0
        %v2026 = vsel %vm344, %v1997, 0
        %v2029 = vsel %vm344, %v1998, 0
        %v2032 = vsel %vm344, %v1999, 0
        %v2035 = vsel %vm344, %v2000, 0
        %v2038 = vsel %vm344, %v2001, 0
        %v2041 = vsel %vm344, %v2002, 0
        %v2044 = vsel %vm344, %v2003, 0
        %v2047 = vsel %vm344, %v2004, 0
        %v2050 = vsel %vm344, %v2005, 0
        %v2053 = vsel %vm344, %v2006, 0
        %v2056 = vsel %vm344, %v2007, 0
        %v2059 = vsel %vm393, %v2009, 0
        %2061 = vmatpush.bf16.msra.mxu0 0
        %2062 = vmatpush.bf16.msra.mxu0 0
        %2063 = vmatpush.bf16.msra.mxu0 0
        %2064 = vmatpush.bf16.msra.mxu0 0
        %2065 = vmatpush.bf16.msra.mxu0 0
        %2066 = vmatpush.bf16.msra.mxu0 0
        %2067 = vmatpush.bf16.msra.mxu0 0
        %2068 = vmatpush.bf16.msra.mxu0 %v2059
        %2069 = vmatmul.bf16.gmra.mxu0 %v2011
        %v2070 = vpop.f32.mrf.mxu0
        %v2071 = vadd.f32 0.0, %v2070
        %v2072 = vpop.f32.mrf.mxu0
        %v2073 = vadd.f32 0.0, %v2072
        %2074 = vmatmul.bf16.gmra.mxu0 %v2014
        %v2075 = vpop.f32.mrf.mxu0
        %v2076 = vadd.f32 0.0, %v2075
        %v2077 = vpop.f32.mrf.mxu0
        %v2078 = vadd.f32 0.0, %v2077
        %2079 = vmatmul.bf16.gmra.mxu0 %v2017
        %v2080 = vpop.f32.mrf.mxu0
        %v2081 = vadd.f32 0.0, %v2080
        %v2082 = vpop.f32.mrf.mxu0
        %v2083 = vadd.f32 0.0, %v2082
        %2084 = vmatmul.bf16.gmra.mxu0 %v2020
        %v2085 = vpop.f32.mrf.mxu0
        %v2086 = vadd.f32 0.0, %v2085
        %v2087 = vpop.f32.mrf.mxu0
        %v2088 = vadd.f32 0.0, %v2087
        %2089 = vmatmul.bf16.gmra.mxu0 %v2023
        %v2090 = vpop.f32.mrf.mxu0
        %v2091 = vadd.f32 0.0, %v2090
        %v2092 = vpop.f32.mrf.mxu0
        %v2093 = vadd.f32 0.0, %v2092
        %2094 = vmatmul.bf16.gmra.mxu0 %v2026
        %v2095 = vpop.f32.mrf.mxu0
        %v2096 = vadd.f32 0.0, %v2095
        %v2097 = vpop.f32.mrf.mxu0
        %v2098 = vadd.f32 0.0, %v2097
        %2099 = vmatmul.bf16.gmra.mxu0 %v2029
        %v2100 = vpop.f32.mrf.mxu0
        %v2101 = vadd.f32 0.0, %v2100
        %v2102 = vpop.f32.mrf.mxu0
        %v2103 = vadd.f32 0.0, %v2102
        %2104 = vmatmul.bf16.gmra.mxu0 %v2032
        %v2105 = vpop.f32.mrf.mxu0
        %v2106 = vadd.f32 0.0, %v2105
        %v2107 = vpop.f32.mrf.mxu0
        %v2108 = vadd.f32 0.0, %v2107
        %2109 = vmatmul.bf16.gmra.mxu0 %v2035
        %v2110 = vpop.f32.mrf.mxu0
        %v2111 = vadd.f32 0.0, %v2110
        %v2112 = vpop.f32.mrf.mxu0
        %v2113 = vadd.f32 0.0, %v2112
        %2114 = vmatmul.bf16.gmra.mxu0 %v2038
        %v2115 = vpop.f32.mrf.mxu0
        %v2116 = vadd.f32 0.0, %v2115
        %v2117 = vpop.f32.mrf.mxu0
        %v2118 = vadd.f32 0.0, %v2117
        %2119 = vmatmul.bf16.gmra.mxu0 %v2041
        %v2120 = vpop.f32.mrf.mxu0
        %v2121 = vadd.f32 0.0, %v2120
        %v2122 = vpop.f32.mrf.mxu0
        %v2123 = vadd.f32 0.0, %v2122
        %2124 = vmatmul.bf16.gmra.mxu0 %v2044
        %v2125 = vpop.f32.mrf.mxu0
        %v2126 = vadd.f32 0.0, %v2125
        %v2127 = vpop.f32.mrf.mxu0
        %v2128 = vadd.f32 0.0, %v2127
        %2129 = vmatmul.bf16.gmra.mxu0 %v2047
        %v2130 = vpop.f32.mrf.mxu0
        %v2131 = vadd.f32 0.0, %v2130
        %v2132 = vpop.f32.mrf.mxu0
        %v2133 = vadd.f32 0.0, %v2132
        %2134 = vmatmul.bf16.gmra.mxu0 %v2050
        %v2135 = vpop.f32.mrf.mxu0
        %v2136 = vadd.f32 0.0, %v2135
        %v2137 = vpop.f32.mrf.mxu0
        %v2138 = vadd.f32 0.0, %v2137
        %2139 = vmatmul.bf16.gmra.mxu0 %v2053
        %v2140 = vpop.f32.mrf.mxu0
        %v2141 = vadd.f32 0.0, %v2140
        %v2142 = vpop.f32.mrf.mxu0
        %v2143 = vadd.f32 0.0, %v2142
        %2144 = vmatmul.bf16.gmra.mxu0 %v2056
        %v2145 = vpop.f32.mrf.mxu0
        %v2146 = vadd.f32 0.0, %v2145
        %v2147 = vpop.f32.mrf.mxu0
        %v2148 = vadd.f32 0.0, %v2147
        %2149 = vdwg.mxu0
        %v2150 = vadd.f32 %v1928, %v2071
        %v2151 = vadd.f32 %v1929, %v2073
        %v2152 = vadd.f32 %v1930, %v2076
        %v2153 = vadd.f32 %v1931, %v2078
        %v2154 = vadd.f32 %v1932, %v2081
        %v2155 = vadd.f32 %v1933, %v2083
        %v2156 = vadd.f32 %v1934, %v2086
        %v2157 = vadd.f32 %v1935, %v2088
        %v2158 = vadd.f32 %v1936, %v2091
        %v2159 = vadd.f32 %v1937, %v2093
        %v2160 = vadd.f32 %v1938, %v2096
        %v2161 = vadd.f32 %v1939, %v2098
        %v2162 = vadd.f32 %v1940, %v2101
        %v2163 = vadd.f32 %v1941, %v2103
        %v2164 = vadd.f32 %v1942, %v2106
        %v2165 = vadd.f32 %v1943, %v2108
        %v2166 = vadd.f32 %v1944, %v2111
        %v2167 = vadd.f32 %v1945, %v2113
        %v2168 = vadd.f32 %v1946, %v2116
        %v2169 = vadd.f32 %v1947, %v2118
        %v2170 = vadd.f32 %v1948, %v2121
        %v2171 = vadd.f32 %v1949, %v2123
        %v2172 = vadd.f32 %v1950, %v2126
        %v2173 = vadd.f32 %v1951, %v2128
        %v2174 = vadd.f32 %v1952, %v2131
        %v2175 = vadd.f32 %v1953, %v2133
        %v2176 = vadd.f32 %v1954, %v2136
        %v2177 = vadd.f32 %v1955, %v2138
        %v2178 = vadd.f32 %v1956, %v2141
        %v2179 = vadd.f32 %v1957, %v2143
        %v2180 = vadd.f32 %v1958, %v2146
        %v2181 = vadd.f32 %v1959, %v2148
        %v2182 = vld [vmem:[%s2] sm:$0x1]
        %v2184 = vperm.slane %v2182, 0
        %v2186 = vadd.f32 %v2150, %v2184
        %v2187 = vadd.f32 %v2151, %v2184
        %v2188 = vadd.f32 %v2152, %v2184
        %v2189 = vadd.f32 %v2153, %v2184
        %v2190 = vadd.f32 %v2154, %v2184
        %v2191 = vadd.f32 %v2155, %v2184
        %v2192 = vadd.f32 %v2156, %v2184
        %v2193 = vadd.f32 %v2157, %v2184
        %v2194 = vadd.f32 %v2158, %v2184
        %v2195 = vadd.f32 %v2159, %v2184
        %v2196 = vadd.f32 %v2160, %v2184
        %v2197 = vadd.f32 %v2161, %v2184
        %v2198 = vadd.f32 %v2162, %v2184
        %v2199 = vadd.f32 %v2163, %v2184
        %v2200 = vadd.f32 %v2164, %v2184
        %v2201 = vadd.f32 %v2165, %v2184
        %v2202 = vadd.f32 %v2166, %v2184
        %v2203 = vadd.f32 %v2167, %v2184
        %v2204 = vadd.f32 %v2168, %v2184
        %v2205 = vadd.f32 %v2169, %v2184
        %v2206 = vadd.f32 %v2170, %v2184
        %v2207 = vadd.f32 %v2171, %v2184
        %v2208 = vadd.f32 %v2172, %v2184
        %v2209 = vadd.f32 %v2173, %v2184
        %v2210 = vadd.f32 %v2174, %v2184
        %v2211 = vadd.f32 %v2175, %v2184
        %v2212 = vadd.f32 %v2176, %v2184
        %v2213 = vadd.f32 %v2177, %v2184
        %v2214 = vadd.f32 %v2178, %v2184
        %v2215 = vadd.f32 %v2179, %v2184
        %v2216 = vadd.f32 %v2180, %v2184
        %v2217 = vadd.f32 %v2181, %v2184
        %v2218 = vmax.f32 %v2186, 0.0
        %v2219 = vmax.f32 %v2187, 0.0
        %v2220 = vmax.f32 %v2188, 0.0
        %v2221 = vmax.f32 %v2189, 0.0
        %v2222 = vmax.f32 %v2190, 0.0
        %v2223 = vmax.f32 %v2191, 0.0
        %v2224 = vmax.f32 %v2192, 0.0
        %v2225 = vmax.f32 %v2193, 0.0
        %v2226 = vmax.f32 %v2194, 0.0
        %v2227 = vmax.f32 %v2195, 0.0
        %v2228 = vmax.f32 %v2196, 0.0
        %v2229 = vmax.f32 %v2197, 0.0
        %v2230 = vmax.f32 %v2198, 0.0
        %v2231 = vmax.f32 %v2199, 0.0
        %v2232 = vmax.f32 %v2200, 0.0
        %v2233 = vmax.f32 %v2201, 0.0
        %v2234 = vmax.f32 %v2202, 0.0
        %v2235 = vmax.f32 %v2203, 0.0
        %v2236 = vmax.f32 %v2204, 0.0
        %v2237 = vmax.f32 %v2205, 0.0
        %v2238 = vmax.f32 %v2206, 0.0
        %v2239 = vmax.f32 %v2207, 0.0
        %v2240 = vmax.f32 %v2208, 0.0
        %v2241 = vmax.f32 %v2209, 0.0
        %v2242 = vmax.f32 %v2210, 0.0
        %v2243 = vmax.f32 %v2211, 0.0
        %v2244 = vmax.f32 %v2212, 0.0
        %v2245 = vmax.f32 %v2213, 0.0
        %v2246 = vmax.f32 %v2214, 0.0
        %v2247 = vmax.f32 %v2215, 0.0
        %v2248 = vmax.f32 %v2216, 0.0
        %v2249 = vmax.f32 %v2217, 0.0
        %vm2250 = vcmask 64512
        %v2251 = vsel %vm2250, %v2218, 0.0
        %v2252 = vsel %vm2250, %v2219, 0.0
        %v2253 = vadd.f32 %v2251, %v2252
        %v2254 = vsel %vm2250, %v2220, 0.0
        %v2255 = vadd.f32 %v2253, %v2254
        %v2256 = vsel %vm2250, %v2221, 0.0
        %v2257 = vadd.f32 %v2255, %v2256
        %v2258 = vsel %vm2250, %v2222, 0.0
        %v2259 = vadd.f32 %v2257, %v2258
        %v2260 = vsel %vm2250, %v2223, 0.0
        %v2261 = vadd.f32 %v2259, %v2260
        %v2262 = vsel %vm2250, %v2224, 0.0
        %v2263 = vadd.f32 %v2261, %v2262
        %v2264 = vsel %vm2250, %v2225, 0.0
        %v2265 = vadd.f32 %v2263, %v2264
        %v2266 = vsel %vm2250, %v2226, 0.0
        %v2267 = vadd.f32 %v2265, %v2266
        %v2268 = vsel %vm2250, %v2227, 0.0
        %v2269 = vadd.f32 %v2267, %v2268
        %v2270 = vsel %vm2250, %v2228, 0.0
        %v2271 = vadd.f32 %v2269, %v2270
        %v2272 = vsel %vm2250, %v2229, 0.0
        %v2273 = vadd.f32 %v2271, %v2272
        %v2274 = vsel %vm2250, %v2230, 0.0
        %v2275 = vadd.f32 %v2273, %v2274
        %v2276 = vsel %vm2250, %v2231, 0.0
        %v2277 = vadd.f32 %v2275, %v2276
        %v2278 = vsel %vm2250, %v2232, 0.0
        %v2279 = vadd.f32 %v2277, %v2278
        %v2280 = vsel %vm2250, %v2233, 0.0
        %v2281 = vadd.f32 %v2279, %v2280
        %v2282 = vsel %vm2250, %v2234, 0.0
        %v2283 = vadd.f32 %v2281, %v2282
        %v2284 = vsel %vm2250, %v2235, 0.0
        %v2285 = vadd.f32 %v2283, %v2284
        %v2286 = vsel %vm2250, %v2236, 0.0
        %v2287 = vadd.f32 %v2285, %v2286
        %v2288 = vsel %vm2250, %v2237, 0.0
        %v2289 = vadd.f32 %v2287, %v2288
        %v2290 = vsel %vm2250, %v2238, 0.0
        %v2291 = vadd.f32 %v2289, %v2290
        %v2292 = vsel %vm2250, %v2239, 0.0
        %v2293 = vadd.f32 %v2291, %v2292
        %v2294 = vsel %vm2250, %v2240, 0.0
        %v2295 = vadd.f32 %v2293, %v2294
        %v2296 = vsel %vm2250, %v2241, 0.0
        %v2297 = vadd.f32 %v2295, %v2296
        %v2298 = vsel %vm2250, %v2242, 0.0
        %v2299 = vadd.f32 %v2297, %v2298
        %v2300 = vsel %vm2250, %v2243, 0.0
        %v2301 = vadd.f32 %v2299, %v2300
        %v2302 = vsel %vm2250, %v2244, 0.0
        %v2303 = vadd.f32 %v2301, %v2302
        %v2304 = vsel %vm2250, %v2245, 0.0
        %v2305 = vadd.f32 %v2303, %v2304
        %v2306 = vsel %vm2250, %v2246, 0.0
        %v2307 = vadd.f32 %v2305, %v2306
        %v2308 = vsel %vm2250, %v2247, 0.0
        %v2309 = vadd.f32 %v2307, %v2308
        %v2310 = vsel %vm2250, %v2248, 0.0
        %v2311 = vadd.f32 %v2309, %v2310
        %v2312 = vsel %vm2250, %v2249, 0.0
        %v2313 = vadd.f32 %v2311, %v2312
        %v2314 = vrot.slane %v2313, 4
        %v2315 = vadd.f32 %v2313, %v2314
        %v2316 = vrot.slane %v2315, 2
        %v2317 = vadd.f32 %v2315, %v2316
        %v2318 = vrot.slane %v2317, 1
        %v2319 = vadd.f32 %v2317, %v2318
        %vm2320 = vcmask 57344
        %2321 = vst.msk [vmem:[%s227] sm:$0x1] %vm2320, %v2319
        %v2322 = vmul.f32 %v2218, %v2218
        %v2323 = vmul.f32 %v2219, %v2219
        %v2324 = vmul.f32 %v2220, %v2220
        %v2325 = vmul.f32 %v2221, %v2221
        %v2326 = vmul.f32 %v2222, %v2222
        %v2327 = vmul.f32 %v2223, %v2223
        %v2328 = vmul.f32 %v2224, %v2224
        %v2329 = vmul.f32 %v2225, %v2225
        %v2330 = vmul.f32 %v2226, %v2226
        %v2331 = vmul.f32 %v2227, %v2227
        %v2332 = vmul.f32 %v2228, %v2228
        %v2333 = vmul.f32 %v2229, %v2229
        %v2334 = vmul.f32 %v2230, %v2230
        %v2335 = vmul.f32 %v2231, %v2231
        %v2336 = vmul.f32 %v2232, %v2232
        %v2337 = vmul.f32 %v2233, %v2233
        %v2338 = vmul.f32 %v2234, %v2234
        %v2339 = vmul.f32 %v2235, %v2235
        %v2340 = vmul.f32 %v2236, %v2236
        %v2341 = vmul.f32 %v2237, %v2237
        %v2342 = vmul.f32 %v2238, %v2238
        %v2343 = vmul.f32 %v2239, %v2239
        %v2344 = vmul.f32 %v2240, %v2240
        %v2345 = vmul.f32 %v2241, %v2241
        %v2346 = vmul.f32 %v2242, %v2242
        %v2347 = vmul.f32 %v2243, %v2243
        %v2348 = vmul.f32 %v2244, %v2244
        %v2349 = vmul.f32 %v2245, %v2245
        %v2350 = vmul.f32 %v2246, %v2246
        %v2351 = vmul.f32 %v2247, %v2247
        %v2352 = vmul.f32 %v2248, %v2248
        %v2353 = vmul.f32 %v2249, %v2249
        %v2354 = vsel %vm2250, %v2322, 0.0
        %v2355 = vsel %vm2250, %v2323, 0.0
        %v2356 = vadd.f32 %v2354, %v2355
        %v2357 = vsel %vm2250, %v2324, 0.0
        %v2358 = vadd.f32 %v2356, %v2357
        %v2359 = vsel %vm2250, %v2325, 0.0
        %v2360 = vadd.f32 %v2358, %v2359
        %v2361 = vsel %vm2250, %v2326, 0.0
        %v2362 = vadd.f32 %v2360, %v2361
        %v2363 = vsel %vm2250, %v2327, 0.0
        %v2364 = vadd.f32 %v2362, %v2363
        %v2365 = vsel %vm2250, %v2328, 0.0
        %v2366 = vadd.f32 %v2364, %v2365
        %v2367 = vsel %vm2250, %v2329, 0.0
        %v2368 = vadd.f32 %v2366, %v2367
        %v2369 = vsel %vm2250, %v2330, 0.0
        %v2370 = vadd.f32 %v2368, %v2369
        %v2371 = vsel %vm2250, %v2331, 0.0
        %v2372 = vadd.f32 %v2370, %v2371
        %v2373 = vsel %vm2250, %v2332, 0.0
        %v2374 = vadd.f32 %v2372, %v2373
        %v2375 = vsel %vm2250, %v2333, 0.0
        %v2376 = vadd.f32 %v2374, %v2375
        %v2377 = vsel %vm2250, %v2334, 0.0
        %v2378 = vadd.f32 %v2376, %v2377
        %v2379 = vsel %vm2250, %v2335, 0.0
        %v2380 = vadd.f32 %v2378, %v2379
        %v2381 = vsel %vm2250, %v2336, 0.0
        %v2382 = vadd.f32 %v2380, %v2381
        %v2383 = vsel %vm2250, %v2337, 0.0
        %v2384 = vadd.f32 %v2382, %v2383
        %v2385 = vsel %vm2250, %v2338, 0.0
        %v2386 = vadd.f32 %v2384, %v2385
        %v2387 = vsel %vm2250, %v2339, 0.0
        %v2388 = vadd.f32 %v2386, %v2387
        %v2389 = vsel %vm2250, %v2340, 0.0
        %v2390 = vadd.f32 %v2388, %v2389
        %v2391 = vsel %vm2250, %v2341, 0.0
        %v2392 = vadd.f32 %v2390, %v2391
        %v2393 = vsel %vm2250, %v2342, 0.0
        %v2394 = vadd.f32 %v2392, %v2393
        %v2395 = vsel %vm2250, %v2343, 0.0
        %v2396 = vadd.f32 %v2394, %v2395
        %v2397 = vsel %vm2250, %v2344, 0.0
        %v2398 = vadd.f32 %v2396, %v2397
        %v2399 = vsel %vm2250, %v2345, 0.0
        %v2400 = vadd.f32 %v2398, %v2399
        %v2401 = vsel %vm2250, %v2346, 0.0
        %v2402 = vadd.f32 %v2400, %v2401
        %v2403 = vsel %vm2250, %v2347, 0.0
        %v2404 = vadd.f32 %v2402, %v2403
        %v2405 = vsel %vm2250, %v2348, 0.0
        %v2406 = vadd.f32 %v2404, %v2405
        %v2407 = vsel %vm2250, %v2349, 0.0
        %v2408 = vadd.f32 %v2406, %v2407
        %v2409 = vsel %vm2250, %v2350, 0.0
        %v2410 = vadd.f32 %v2408, %v2409
        %v2411 = vsel %vm2250, %v2351, 0.0
        %v2412 = vadd.f32 %v2410, %v2411
        %v2413 = vsel %vm2250, %v2352, 0.0
        %v2414 = vadd.f32 %v2412, %v2413
        %v2415 = vsel %vm2250, %v2353, 0.0
        %v2416 = vadd.f32 %v2414, %v2415
        %v2417 = vrot.slane %v2416, 4
        %v2418 = vadd.f32 %v2416, %v2417
        %v2419 = vrot.slane %v2418, 2
        %v2420 = vadd.f32 %v2418, %v2419
        %v2421 = vrot.slane %v2420, 1
        %v2422 = vadd.f32 %v2420, %v2421
        %2423 = vst.msk [vmem:[%s233] sm:$0x1] %vm2320, %v2422
        %2424 = vst.msk [vmem:[%s243] sm:$0xff] %vm2250, 0.0
        %2425 = vst.msk [vmem:[%s243 + $0x8] sm:$0xff] %vm2250, 0.0
        %vm2426 = vcmask 58368
        %2427 = vst.msk [vmem:[%s243 + $0x10] sm:$0x3] %vm2426, 0.0
        %s2428 = scalar_lea.vmem %s243, 408
        %2429 = vst.msk [vmem:[%s2428] sm:$0xff] %vm2250, 0.0
        %2430 = vst.msk [vmem:[%s2428 + $0x8] sm:$0xff] %vm2250, 0.0
        %2431 = vst.msk [vmem:[%s2428 + $0x10] sm:$0x3] %vm2426, 0.0
        %2432 = vst.msk [vmem:[%s243] sm:$0x1] %vm2320, 0.0
        %2433 = vst.msk [vmem:[%s243 + $0x18] sm:$0x1] %vm2320, 0.0
        %2434 = vst.msk [vmem:[%s243 + $0x30] sm:$0x1] %vm2320, 0.0
        %2435 = vst.msk [vmem:[%s243 + $0x48] sm:$0x1] %vm2320, 0.0
        %2436 = vst.msk [vmem:[%s243 + $0x60] sm:$0x1] %vm2320, 0.0
        %2437 = vst.msk [vmem:[%s243 + $0x78] sm:$0x1] %vm2320, 0.0
        %2438 = vst.msk [vmem:[%s243 + $0x90] sm:$0x1] %vm2320, 0.0
        %2439 = vst.msk [vmem:[%s243 + $0xa8] sm:$0x1] %vm2320, 0.0
        %2440 = vst.msk [vmem:[%s243 + $0xc0] sm:$0x1] %vm2320, 0.0
        %2441 = vst.msk [vmem:[%s243 + $0xd8] sm:$0x1] %vm2320, 0.0
        %2442 = vst.msk [vmem:[%s243 + $0xf0] sm:$0x1] %vm2320, 0.0
        %2443 = vst.msk [vmem:[%s243 + $0x108] sm:$0x1] %vm2320, 0.0
        %2444 = vst.msk [vmem:[%s243 + $0x120] sm:$0x1] %vm2320, 0.0
        %2445 = vst.msk [vmem:[%s243 + $0x138] sm:$0x1] %vm2320, 0.0
        %2446 = vst.msk [vmem:[%s243 + $0x150] sm:$0x1] %vm2320, 0.0
        %2447 = vst.msk [vmem:[%s243 + $0x168] sm:$0x1] %vm2320, 0.0
        %2448 = vst.msk [vmem:[%s243 + $0x180] sm:$0x1] %vm2320, 0.0
        %2449 = vst.msk [vmem:[%s243 + $0x198] sm:$0x1] %vm2320, 0.0
        %2450 = vst.msk [vmem:[%s243 + $0x11] sm:$0x1] %vm2320, 0.0
        %2451 = vst.msk [vmem:[%s243 + $0x29] sm:$0x1] %vm2320, 0.0
        %2452 = vst.msk [vmem:[%s243 + $0x41] sm:$0x1] %vm2320, 0.0
        %2453 = vst.msk [vmem:[%s243 + $0x59] sm:$0x1] %vm2320, 0.0
        %2454 = vst.msk [vmem:[%s243 + $0x71] sm:$0x1] %vm2320, 0.0
        %2455 = vst.msk [vmem:[%s243 + $0x89] sm:$0x1] %vm2320, 0.0
        %2456 = vst.msk [vmem:[%s243 + $0xa1] sm:$0x1] %vm2320, 0.0
        %2457 = vst.msk [vmem:[%s243 + $0xb9] sm:$0x1] %vm2320, 0.0
        %2458 = vst.msk [vmem:[%s243 + $0xd1] sm:$0x1] %vm2320, 0.0
        %2459 = vst.msk [vmem:[%s243 + $0xe9] sm:$0x1] %vm2320, 0.0
        %2460 = vst.msk [vmem:[%s243 + $0x101] sm:$0x1] %vm2320, 0.0
        %2461 = vst.msk [vmem:[%s243 + $0x119] sm:$0x1] %vm2320, 0.0
        %2462 = vst.msk [vmem:[%s243 + $0x131] sm:$0x1] %vm2320, 0.0
        %2463 = vst.msk [vmem:[%s243 + $0x149] sm:$0x1] %vm2320, 0.0
        %2464 = vst.msk [vmem:[%s243 + $0x161] sm:$0x1] %vm2320, 0.0
        %2465 = vst.msk [vmem:[%s243 + $0x179] sm:$0x1] %vm2320, 0.0
        %2466 = vst.msk [vmem:[%s243 + $0x191] sm:$0x1] %vm2320, 0.0
        %2467 = vst.msk [vmem:[%s243 + $0x1a9] sm:$0x1] %vm2320, 0.0
        %s2468 = scalar_lea.vmem %s243, 24
        %2469 = vst.msk [vmem:[%s2468 + $0x1] sm:$0xff] %vm2250, %v2218
        %2470 = vst.msk [vmem:[%s2468 + $0x9] sm:$0xff] %vm2250, %v2219
        %2471 = vst.msk [vmem:[%s2468 + $0x19] sm:$0xff] %vm2250, %v2220
        %2472 = vst.msk [vmem:[%s2468 + $0x21] sm:$0xff] %vm2250, %v2221
        %2473 = vst.msk [vmem:[%s2468 + $0x31] sm:$0xff] %vm2250, %v2222
        %2474 = vst.msk [vmem:[%s2468 + $0x39] sm:$0xff] %vm2250, %v2223
        %2475 = vst.msk [vmem:[%s2468 + $0x49] sm:$0xff] %vm2250, %v2224
        %2476 = vst.msk [vmem:[%s2468 + $0x51] sm:$0xff] %vm2250, %v2225
        %2477 = vst.msk [vmem:[%s2468 + $0x61] sm:$0xff] %vm2250, %v2226
        %2478 = vst.msk [vmem:[%s2468 + $0x69] sm:$0xff] %vm2250, %v2227
        %2479 = vst.msk [vmem:[%s2468 + $0x79] sm:$0xff] %vm2250, %v2228
        %2480 = vst.msk [vmem:[%s2468 + $0x81] sm:$0xff] %vm2250, %v2229
        %2481 = vst.msk [vmem:[%s2468 + $0x91] sm:$0xff] %vm2250, %v2230
        %2482 = vst.msk [vmem:[%s2468 + $0x99] sm:$0xff] %vm2250, %v2231
        %2483 = vst.msk [vmem:[%s2468 + $0xa9] sm:$0xff] %vm2250, %v2232
        %2484 = vst.msk [vmem:[%s2468 + $0xb1] sm:$0xff] %vm2250, %v2233
        %2485 = vst.msk [vmem:[%s2468 + $0xc1] sm:$0xff] %vm2250, %v2234
        %2486 = vst.msk [vmem:[%s2468 + $0xc9] sm:$0xff] %vm2250, %v2235
        %2487 = vst.msk [vmem:[%s2468 + $0xd9] sm:$0xff] %vm2250, %v2236
        %2488 = vst.msk [vmem:[%s2468 + $0xe1] sm:$0xff] %vm2250, %v2237
        %2489 = vst.msk [vmem:[%s2468 + $0xf1] sm:$0xff] %vm2250, %v2238
        %2490 = vst.msk [vmem:[%s2468 + $0xf9] sm:$0xff] %vm2250, %v2239
        %2491 = vst.msk [vmem:[%s2468 + $0x109] sm:$0xff] %vm2250, %v2240
        %2492 = vst.msk [vmem:[%s2468 + $0x111] sm:$0xff] %vm2250, %v2241
        %2493 = vst.msk [vmem:[%s2468 + $0x121] sm:$0xff] %vm2250, %v2242
        %2494 = vst.msk [vmem:[%s2468 + $0x129] sm:$0xff] %vm2250, %v2243
        %2495 = vst.msk [vmem:[%s2468 + $0x139] sm:$0xff] %vm2250, %v2244
        %2496 = vst.msk [vmem:[%s2468 + $0x141] sm:$0xff] %vm2250, %v2245
        %2497 = vst.msk [vmem:[%s2468 + $0x151] sm:$0xff] %vm2250, %v2246
        %2498 = vst.msk [vmem:[%s2468 + $0x159] sm:$0xff] %vm2250, %v2247
        %2499 = vst.msk [vmem:[%s2468 + $0x169] sm:$0xff] %vm2250, %v2248
        %2500 = vst.msk [vmem:[%s2468 + $0x171] sm:$0xff] %vm2250, %v2249
        %p2501 = scmp.lt.s32.totalorder %s23, 1
        %s2502 = scalar_select %p2501, %s23, 1
        %s2503 = smul.addr %s2502, 54
        %s2504 = smul.addr %s2503, 8
        %s2505 = scalar_lea.vmem %s3, %s2504
        %s2506 = sand.u32 %s125, 1
        %s2507 = scalar_lea.sflag [#allocation3], %s2506
        %s2508 = sand.u32 %s125, 1
        %s2509 = scalar_lea.vmem [#allocation2], %s2508
        %s2510 = sand.u32 %s151, 1
        %s2511 = scalar_lea.sflag [#allocation5], %s2510
        %s2512 = sand.u32 %s151, 1
        %s2513 = scalar_lea.vmem [#allocation4], %s2512
        // Predicated region
        $region33: #{tpu_custom_call.1} parent=31 // pred_check
          %p2514 = pneg %p109
        $region34: #{tpu_custom_call.1} parent=31 // pred_check_branch
          %2516 = sbr.rel (%p2514) target = $region36
        $region35: #{tpu_custom_call.1} parent=31 // pred_region
          _
        $region36: #{tpu_custom_call.1} parent=31 // pred_fallthru
          _
        // Predicated region
        $region37: #{tpu_custom_call.1} parent=31 // pred_check
          %p2517 = pneg %p135
        $region38: #{tpu_custom_call.1} parent=31 // pred_check_branch
          %2519 = sbr.rel (%p2517) target = $region40
        $region39: #{tpu_custom_call.1} parent=31 // pred_region
          %2521 = vsyncadd %s2507, 0
          %s2522 = scalar_lea.hbm %s4, %s23
          %s2524 = sshll.u32 %s2509, 4
          %s2525 = int_to_ptr.vmem [resolvable:$true] %s2524
          %s2526 = sshll.u32 %s2522, 4
          %s2527 = int_to_ptr.hbm [resolvable:$true] %s2526
          %2529 = dma.vmem_to_hbm [thread:$0]  %s2525, 16, %s2527, %s2507
        $region40: #{tpu_custom_call.1} parent=31 // pred_fallthru
          _
        // Predicated region
        $region41: #{tpu_custom_call.1} parent=31 // pred_check
          %p2530 = pneg %p161
        $region42: #{tpu_custom_call.1} parent=31 // pred_check_branch
          %2532 = sbr.rel (%p2530) target = $region44
        $region43: #{tpu_custom_call.1} parent=31 // pred_region
          %2534 = vsyncadd %s2511, 0
          %s2535 = scalar_lea.hbm %s5, %s23
          %s2537 = sshll.u32 %s2513, 4
          %s2538 = int_to_ptr.vmem [resolvable:$true] %s2537
          %s2539 = sshll.u32 %s2535, 4
          %s2540 = int_to_ptr.hbm [resolvable:$true] %s2539
          %2542 = dma.vmem_to_hbm [thread:$0]  %s2538, 16, %s2540, %s2511
        $region44: #{tpu_custom_call.1} parent=31 // pred_fallthru
          _
      $region32: #{tpu_custom_call.1} parent=5 // pred_fallthru
        _
      %p2543 = scmp.le.s32.totalorder 2, %s18
      // Predicated region
      $region45: #{tpu_custom_call.1} parent=5 // pred_check
        %p2544 = pneg %p2543
      $region46: #{tpu_custom_call.1} parent=5 // pred_check_branch
        %2546 = sbr.rel (%p2544) target = $region48
      $region47: #{tpu_custom_call.1} parent=5 // pred_region
        %s2547 = ssub.s32 %s18, 2
        // Predicated region
        $region49: #{tpu_custom_call.1} parent=47 // pred_check
          %p2548 = pneg %p115
        $region50: #{tpu_custom_call.1} parent=47 // pred_check_branch
          %2550 = sbr.rel (%p2548) target = $region52
        $region51: #{tpu_custom_call.1} parent=47 // pred_region
          %p2551 = scmp.lt.s32.totalorder %s24, 1
          %s2552 = scalar_select %p2551, %s24, 1
          %s2553 = smul.addr %s2552, 54
          %s2554 = smul.addr %s2553, 8
          %s2555 = scalar_lea.vmem %s3, %s2554
        $region52: #{tpu_custom_call.1} parent=47 // pred_fallthru
          _
        // Predicated region
        $region53: #{tpu_custom_call.1} parent=47 // pred_check
          %p2556 = pneg %p141
        $region54: #{tpu_custom_call.1} parent=47 // pred_check_branch
          %2558 = sbr.rel (%p2556) target = $region56
        $region55: #{tpu_custom_call.1} parent=47 // pred_region
          %s2559 = sand.u32 %s126, 1
          %s2560 = scalar_lea.sflag [#allocation3], %s2559
          %s2561 = sand.u32 %s126, 1
          %s2562 = scalar_lea.vmem [#allocation2], %s2561
          %2564 = dma.done %s2560, 16
        $region56: #{tpu_custom_call.1} parent=47 // pred_fallthru
          _
        // Predicated region
        $region57: #{tpu_custom_call.1} parent=47 // pred_check
          %p2565 = pneg %p167
        $region58: #{tpu_custom_call.1} parent=47 // pred_check_branch
          %2567 = sbr.rel (%p2565) target = $region60
        $region59: #{tpu_custom_call.1} parent=47 // pred_region
          %s2568 = sand.u32 %s152, 1
          %s2569 = scalar_lea.sflag [#allocation5], %s2568
          %s2570 = sand.u32 %s152, 1
          %s2571 = scalar_lea.vmem [#allocation4], %s2570
          %2573 = dma.done %s2569, 16
        $region60: #{tpu_custom_call.1} parent=47 // pred_fallthru
          _
      $region48: #{tpu_custom_call.1} parent=5 // pred_fallthru
        _
    $region6: #{tpu_custom_call.1} parent=1 // loop_footer
      %s22 = sadd.s32 1, %s18
    $region7: #{tpu_custom_call.1} parent=1 // loop_footer_branch
      %17 = sbr.rel target = $region3
    $region8: #{tpu_custom_call.1} parent=1 // loop_exit
      _
    %2574 = vsyncpa [#allocation3], 1
    %s2575 = scalar_lea.sflag [#allocation3], 1
    %2576 = vsyncpa %s2575, 1
    %2577 = vsyncpa [#allocation5], 1
    %s2578 = scalar_lea.sflag [#allocation5], 1
    %2579 = vsyncpa %s2578, 1

</llo_original>
